<compile_context>
chip_gen: v7x
topology: tpu7x:2x2x1
jax: 0.10.0
libtpu: 0.0.40
codegen_flags: <defaults>
</compile_context>

<pallas_src>
import jax
import jax.numpy as jnp
from jax.experimental import pallas as pl
from jax.experimental.pallas import tpu as pltpu


# ----------------------------- fused Pallas kernel ---------------------------

def _fused_kernel(patches_ref, w1_ref, b1_ref, wf_ref, b2_ref, out_ref, pad_ref):
    # ---- Conv2d(1, 64, k=3): (576, 9) @ (9, 64) on the MXU, + bias ----------
    v1 = jnp.dot(patches_ref[...], w1_ref[...],
                 preferred_element_type=jnp.float32) + b1_ref[...]      # (576, 64)

    # ---- MaxPool2d(kernel_size=3): rows are ordered d*64 + p, where
    #      d = within-window offset (9 values) and p = pooled position (64).
    #      Reduce over the nine aligned 64-row slabs on the VPU. --------------
    v2 = v1[0:64, :]
    for d in range(1, 9):
        v2 = jnp.maximum(v2, v1[d * 64:(d + 1) * 64, :])                # (64, 64)

    # ---- ConvTranspose2d(64, 1, k=3) == correlation of the zero-padded (pad=2)
    #      pooled map with the flipped kernel.  Channels stay on lanes. -------
    pad_ref[...] = jnp.zeros_like(pad_ref)                              # (12, 12, 64)
    for i in range(8):  # place the 8x8x64 pooled map at [2:10, 2:10, :]
        pad_ref[2 + i, 2:10, :] = v2[i * 8:(i + 1) * 8, :]

    # tap-sum on the VPU: s[h, w, c] = sum_t padded[h+kh, w+kw, c] * wf[t, c]
    s = pad_ref[0:10, 0:10, :] * wf_ref[0, :]
    for kh in range(3):
        for kw in range(3):
            if kh == 0 and kw == 0:
                continue
            t = kh * 3 + kw
            s = s + pad_ref[kh:kh + 10, kw:kw + 10, :] * wf_ref[t, :]

    # channel (lane) reduction + bias -> (10, 10)
    out_ref[...] = jnp.sum(s, axis=-1) + b2_ref[...]


# ------------------------------ model forward --------------------------------

def model_forward(x_nchw, params):
    w1 = params["conv_w"]     # (64, 1, 3, 3)  PyTorch Conv2d weight layout
    b1 = params["conv_b"]     # (64,)
    w2 = params["convt_w"]    # (64, 1, 3, 3)  PyTorch ConvTranspose2d (Cin, Cout, kh, kw)
    b2 = params["convt_b"]    # (1,)

    N, Cin, H, W = x_nchw.shape
    assert (N, Cin, H, W) == (1, 1, 28, 28)
    x = x_nchw[0, 0].astype(jnp.float32)                                # (28, 28)

    # im2col restricted to the 24x24 conv outputs the pool consumes, with rows
    # pre-grouped by pool-window offset: row r = (dh*3+dw)*64 + (i*8+j).
    # Tiny (576 x 9 f32 ~ 20 KiB); produced by one XLA fusion.
    cols = jnp.stack([x[kh:kh + 24, kw:kw + 24]
                      for kh in range(3) for kw in range(3)], axis=-1)  # (24,24,9) [a,b,t]
    cols = cols.reshape(8, 3, 8, 3, 9).transpose(1, 3, 0, 2, 4)         # (dh,dw,i,j,t)
    patches = cols.reshape(576, 9)

    # weights reshaped for the kernel
    w1_mat = jnp.transpose(w1[:, 0], (1, 2, 0)).reshape(9, 64).astype(jnp.float32)   # [t, c]
    b1_row = b1.reshape(1, 64).astype(jnp.float32)
    # flipped ConvT taps: wf[t=kh*3+kw, c] = w2[c, 0, 2-kh, 2-kw]
    wf_mat = jnp.transpose(w2[:, 0, ::-1, ::-1], (1, 2, 0)).reshape(9, 64).astype(jnp.float32)
    b2_sc = b2.reshape(1, 1).astype(jnp.float32)

    out = pl.pallas_call(
        _fused_kernel,
        out_shape=jax.ShapeDtypeStruct((10, 10), jnp.float32),
        in_specs=[
            pl.BlockSpec((576, 9), lambda: (0, 0)),
            pl.BlockSpec((9, 64), lambda: (0, 0)),
            pl.BlockSpec((1, 64), lambda: (0, 0)),
            pl.BlockSpec((9, 64), lambda: (0, 0)),
            pl.BlockSpec((1, 1), lambda: (0, 0)),
        ],
        out_specs=pl.BlockSpec((10, 10), lambda: (0, 0)),
        scratch_shapes=[pltpu.VMEM((12, 12, 64), jnp.float32)],         # padded pooled map
    )(patches, w1_mat, b1_row, wf_mat, b2_sc)

    return out.reshape(1, 1, 10, 10)


# -------------------------- pure-JAX reference (check) -----------------------

def _reference_forward(x_nchw, params):
    w1, b1 = params["conv_w"], params["conv_b"]
    w2, b2 = params["convt_w"], params["convt_b"]
    x = x_nchw[0, 0]
    pat = jnp.stack([x[kh:kh + 26, kw:kw + 26]
                     for kh in range(3) for kw in range(3)], axis=-1)   # (26,26,9)
    v1 = jnp.einsum("hwt,ct->hwc", pat, w1[:, 0].reshape(64, 9)) + b1   # (26,26,64)
    v2 = v1[:24, :24].reshape(8, 3, 8, 3, 64).max(axis=(1, 3))          # (8,8,64)
    padded = jnp.pad(v2, ((2, 2), (2, 2), (0, 0)))                      # (12,12,64)
    wf = w2[:, 0, ::-1, ::-1]                                           # (64,3,3)
    out = b2[0] + sum(
        jnp.einsum("hwc,c->hw", padded[kh:kh + 10, kw:kw + 10, :], wf[:, kh, kw])
        for kh in range(3) for kw in range(3))
    return out.reshape(1, 1, 10, 10)


# ---------------------------------- main --------------------------------------

if __name__ == "__main__":
    key = jax.random.PRNGKey(0)
    k1, k2, k3, k4, kx = jax.random.split(key, 5)
    params = {
        "conv_w": 0.1 * jax.random.normal(k1, (64, 1, 3, 3), jnp.float32),
        "conv_b": 0.1 * jax.random.normal(k2, (64,), jnp.float32),
        "convt_w": 0.1 * jax.random.normal(k3, (64, 1, 3, 3), jnp.float32),
        "convt_b": 0.1 * jax.random.normal(k4, (1,), jnp.float32),
    }
    x1 = jax.random.normal(kx, (1, 1, 28, 28), jnp.float32)

    out = jax.jit(model_forward)(x1, params)
    out = jax.block_until_ready(out)
    assert out.shape == (1, 1, 10, 10), out.shape
    assert out.dtype == jnp.float32

    ref = jax.block_until_ready(_reference_forward(x1, params))
    assert bool(jnp.allclose(out, ref, atol=1e-3, rtol=1e-3)), \
        float(jnp.max(jnp.abs(out - ref)))

    print("KERNEL_OK")
</pallas_src>

<mosaic_0001>
module attributes {stable_mosaic.version = 11 : i64} {
  func.func @_fused_kernel(%arg0: memref<576x9xf32, #tpu.memory_space<vmem>>, %arg1: memref<9x64xf32, #tpu.memory_space<vmem>>, %arg2: memref<1x64xf32, #tpu.memory_space<vmem>>, %arg3: memref<9x64xf32, #tpu.memory_space<vmem>>, %arg4: memref<1x1xf32, #tpu.memory_space<vmem>>, %arg5: memref<10x10xf32, #tpu.memory_space<vmem>>, %arg6: memref<12x12x64xf32, #tpu.memory_space<vmem>>) attributes {dimension_semantics = [], scalar_prefetch = 0 : i64, scratch_operands = 1 : i64, tpu.core_type = #tpu.core_type<tc>} {
    %c0 = arith.constant 0 : index
    %c0_0 = arith.constant 0 : index
    %0 = vector.load %arg0[%c0, %c0_0] : memref<576x9xf32, #tpu.memory_space<vmem>>, vector<576x9xf32>
    %c0_1 = arith.constant 0 : index
    %c0_2 = arith.constant 0 : index
    %1 = vector.load %arg1[%c0_1, %c0_2] : memref<9x64xf32, #tpu.memory_space<vmem>>, vector<9x64xf32>
    %cst = arith.constant dense<0.000000e+00> : vector<576x64xf32>
    %2 = tpu.matmul %0, %1, %cst {dimension_numbers = #tpu.dot_dimension_numbers<[1], [0], [0], [1], [0, 0, 1, 1], [], []>} : vector<576x9xf32>, vector<9x64xf32>, vector<576x64xf32> -> vector<576x64xf32>
    %c0_3 = arith.constant 0 : index
    %c0_4 = arith.constant 0 : index
    %3 = vector.load %arg2[%c0_3, %c0_4] : memref<1x64xf32, #tpu.memory_space<vmem>>, vector<1x64xf32>
    %4 = vector.broadcast %3 : vector<1x64xf32> to vector<576x64xf32>
    %5 = arith.addf %2, %4 : vector<576x64xf32>
    %6 = vector.extract_strided_slice %5 {offsets = [0, 0], sizes = [64, 64], strides = [1, 1]} : vector<576x64xf32> to vector<64x64xf32>
    %7 = vector.extract_strided_slice %5 {offsets = [64, 0], sizes = [64, 64], strides = [1, 1]} : vector<576x64xf32> to vector<64x64xf32>
    %8 = arith.maximumf %6, %7 : vector<64x64xf32>
    %9 = vector.extract_strided_slice %5 {offsets = [128, 0], sizes = [64, 64], strides = [1, 1]} : vector<576x64xf32> to vector<64x64xf32>
    %10 = arith.maximumf %8, %9 : vector<64x64xf32>
    %11 = vector.extract_strided_slice %5 {offsets = [192, 0], sizes = [64, 64], strides = [1, 1]} : vector<576x64xf32> to vector<64x64xf32>
    %12 = arith.maximumf %10, %11 : vector<64x64xf32>
    %13 = vector.extract_strided_slice %5 {offsets = [256, 0], sizes = [64, 64], strides = [1, 1]} : vector<576x64xf32> to vector<64x64xf32>
    %14 = arith.maximumf %12, %13 : vector<64x64xf32>
    %15 = vector.extract_strided_slice %5 {offsets = [320, 0], sizes = [64, 64], strides = [1, 1]} : vector<576x64xf32> to vector<64x64xf32>
    %16 = arith.maximumf %14, %15 : vector<64x64xf32>
    %17 = vector.extract_strided_slice %5 {offsets = [384, 0], sizes = [64, 64], strides = [1, 1]} : vector<576x64xf32> to vector<64x64xf32>
    %18 = arith.maximumf %16, %17 : vector<64x64xf32>
    %19 = vector.extract_strided_slice %5 {offsets = [448, 0], sizes = [64, 64], strides = [1, 1]} : vector<576x64xf32> to vector<64x64xf32>
    %20 = arith.maximumf %18, %19 : vector<64x64xf32>
    %21 = vector.extract_strided_slice %5 {offsets = [512, 0], sizes = [64, 64], strides = [1, 1]} : vector<576x64xf32> to vector<64x64xf32>
    %22 = arith.maximumf %20, %21 : vector<64x64xf32>
    %cst_5 = arith.constant 0.000000e+00 : f32
    %23 = vector.broadcast %cst_5 : f32 to vector<12x12x64xf32>
    %c0_6 = arith.constant 0 : index
    %c0_7 = arith.constant 0 : index
    %c0_8 = arith.constant 0 : index
    %24 = vector.load %arg6[%c0_6, %c0_7, %c0_8] : memref<12x12x64xf32, #tpu.memory_space<vmem>>, vector<12x12x64xf32>
    tpu.vector_store %arg6[%c0_6, %c0_7, %c0_8], %23 {strides = array<i32>} : memref<12x12x64xf32, #tpu.memory_space<vmem>>, vector<12x12x64xf32>,
    %25 = vector.extract_strided_slice %22 {offsets = [0, 0], sizes = [8, 64], strides = [1, 1]} : vector<64x64xf32> to vector<8x64xf32>
    %c2 = arith.constant 2 : index
    %c2_9 = arith.constant 2 : index
    %c0_10 = arith.constant 0 : index
    %26 = vector.load %arg6[%c2, %c2_9, %c0_10] : memref<12x12x64xf32, #tpu.memory_space<vmem>>, vector<1x8x64xf32>
    %27 = vector.shape_cast %26 : vector<1x8x64xf32> to vector<8x64xf32>
    %28 = vector.shape_cast %25 : vector<8x64xf32> to vector<1x8x64xf32>
    tpu.vector_store %arg6[%c2, %c2_9, %c0_10], %28 {strides = array<i32>} : memref<12x12x64xf32, #tpu.memory_space<vmem>>, vector<1x8x64xf32>,
    %29 = vector.extract_strided_slice %22 {offsets = [8, 0], sizes = [8, 64], strides = [1, 1]} : vector<64x64xf32> to vector<8x64xf32>
    %c3 = arith.constant 3 : index
    %c2_11 = arith.constant 2 : index
    %c0_12 = arith.constant 0 : index
    %30 = vector.load %arg6[%c3, %c2_11, %c0_12] : memref<12x12x64xf32, #tpu.memory_space<vmem>>, vector<1x8x64xf32>
    %31 = vector.shape_cast %30 : vector<1x8x64xf32> to vector<8x64xf32>
    %32 = vector.shape_cast %29 : vector<8x64xf32> to vector<1x8x64xf32>
    tpu.vector_store %arg6[%c3, %c2_11, %c0_12], %32 {strides = array<i32>} : memref<12x12x64xf32, #tpu.memory_space<vmem>>, vector<1x8x64xf32>,
    %33 = vector.extract_strided_slice %22 {offsets = [16, 0], sizes = [8, 64], strides = [1, 1]} : vector<64x64xf32> to vector<8x64xf32>
    %c4 = arith.constant 4 : index
    %c2_13 = arith.constant 2 : index
    %c0_14 = arith.constant 0 : index
    %34 = vector.load %arg6[%c4, %c2_13, %c0_14] : memref<12x12x64xf32, #tpu.memory_space<vmem>>, vector<1x8x64xf32>
    %35 = vector.shape_cast %34 : vector<1x8x64xf32> to vector<8x64xf32>
    %36 = vector.shape_cast %33 : vector<8x64xf32> to vector<1x8x64xf32>
    tpu.vector_store %arg6[%c4, %c2_13, %c0_14], %36 {strides = array<i32>} : memref<12x12x64xf32, #tpu.memory_space<vmem>>, vector<1x8x64xf32>,
    %37 = vector.extract_strided_slice %22 {offsets = [24, 0], sizes = [8, 64], strides = [1, 1]} : vector<64x64xf32> to vector<8x64xf32>
    %c5 = arith.constant 5 : index
    %c2_15 = arith.constant 2 : index
    %c0_16 = arith.constant 0 : index
    %38 = vector.load %arg6[%c5, %c2_15, %c0_16] : memref<12x12x64xf32, #tpu.memory_space<vmem>>, vector<1x8x64xf32>
    %39 = vector.shape_cast %38 : vector<1x8x64xf32> to vector<8x64xf32>
    %40 = vector.shape_cast %37 : vector<8x64xf32> to vector<1x8x64xf32>
    tpu.vector_store %arg6[%c5, %c2_15, %c0_16], %40 {strides = array<i32>} : memref<12x12x64xf32, #tpu.memory_space<vmem>>, vector<1x8x64xf32>,
    %41 = vector.extract_strided_slice %22 {offsets = [32, 0], sizes = [8, 64], strides = [1, 1]} : vector<64x64xf32> to vector<8x64xf32>
    %c6 = arith.constant 6 : index
    %c2_17 = arith.constant 2 : index
    %c0_18 = arith.constant 0 : index
    %42 = vector.load %arg6[%c6, %c2_17, %c0_18] : memref<12x12x64xf32, #tpu.memory_space<vmem>>, vector<1x8x64xf32>
    %43 = vector.shape_cast %42 : vector<1x8x64xf32> to vector<8x64xf32>
    %44 = vector.shape_cast %41 : vector<8x64xf32> to vector<1x8x64xf32>
    tpu.vector_store %arg6[%c6, %c2_17, %c0_18], %44 {strides = array<i32>} : memref<12x12x64xf32, #tpu.memory_space<vmem>>, vector<1x8x64xf32>,
    %45 = vector.extract_strided_slice %22 {offsets = [40, 0], sizes = [8, 64], strides = [1, 1]} : vector<64x64xf32> to vector<8x64xf32>
    %c7 = arith.constant 7 : index
    %c2_19 = arith.constant 2 : index
    %c0_20 = arith.constant 0 : index
    %46 = vector.load %arg6[%c7, %c2_19, %c0_20] : memref<12x12x64xf32, #tpu.memory_space<vmem>>, vector<1x8x64xf32>
    %47 = vector.shape_cast %46 : vector<1x8x64xf32> to vector<8x64xf32>
    %48 = vector.shape_cast %45 : vector<8x64xf32> to vector<1x8x64xf32>
    tpu.vector_store %arg6[%c7, %c2_19, %c0_20], %48 {strides = array<i32>} : memref<12x12x64xf32, #tpu.memory_space<vmem>>, vector<1x8x64xf32>,
    %49 = vector.extract_strided_slice %22 {offsets = [48, 0], sizes = [8, 64], strides = [1, 1]} : vector<64x64xf32> to vector<8x64xf32>
    %c8 = arith.constant 8 : index
    %c2_21 = arith.constant 2 : index
    %c0_22 = arith.constant 0 : index
    %50 = vector.load %arg6[%c8, %c2_21, %c0_22] : memref<12x12x64xf32, #tpu.memory_space<vmem>>, vector<1x8x64xf32>
    %51 = vector.shape_cast %50 : vector<1x8x64xf32> to vector<8x64xf32>
    %52 = vector.shape_cast %49 : vector<8x64xf32> to vector<1x8x64xf32>
    tpu.vector_store %arg6[%c8, %c2_21, %c0_22], %52 {strides = array<i32>} : memref<12x12x64xf32, #tpu.memory_space<vmem>>, vector<1x8x64xf32>,
    %53 = vector.extract_strided_slice %22 {offsets = [56, 0], sizes = [8, 64], strides = [1, 1]} : vector<64x64xf32> to vector<8x64xf32>
    %c9 = arith.constant 9 : index
    %c2_23 = arith.constant 2 : index
    %c0_24 = arith.constant 0 : index
    %54 = vector.load %arg6[%c9, %c2_23, %c0_24] : memref<12x12x64xf32, #tpu.memory_space<vmem>>, vector<1x8x64xf32>
    %55 = vector.shape_cast %54 : vector<1x8x64xf32> to vector<8x64xf32>
    %56 = vector.shape_cast %53 : vector<8x64xf32> to vector<1x8x64xf32>
    tpu.vector_store %arg6[%c9, %c2_23, %c0_24], %56 {strides = array<i32>} : memref<12x12x64xf32, #tpu.memory_space<vmem>>, vector<1x8x64xf32>,
    %c0_25 = arith.constant 0 : index
    %c0_26 = arith.constant 0 : index
    %c0_27 = arith.constant 0 : index
    %57 = vector.load %arg6[%c0_25, %c0_26, %c0_27] : memref<12x12x64xf32, #tpu.memory_space<vmem>>, vector<10x10x64xf32>
    %c0_28 = arith.constant 0 : index
    %c0_29 = arith.constant 0 : index
    %58 = vector.load %arg3[%c0_28, %c0_29] : memref<9x64xf32, #tpu.memory_space<vmem>>, vector<1x64xf32>
    %59 = vector.shape_cast %58 : vector<1x64xf32> to vector<64xf32>
    %60 = vector.shape_cast %59 : vector<64xf32> to vector<1x1x64xf32>
    %61 = vector.broadcast %60 : vector<1x1x64xf32> to vector<10x10x64xf32>
    %62 = arith.mulf %57, %61 : vector<10x10x64xf32>
    %c0_30 = arith.constant 0 : index
    %c1 = arith.constant 1 : index
    %c0_31 = arith.constant 0 : index
    %63 = vector.load %arg6[%c0_30, %c1, %c0_31] : memref<12x12x64xf32, #tpu.memory_space<vmem>>, vector<10x10x64xf32>
    %c1_32 = arith.constant 1 : index
    %c0_33 = arith.constant 0 : index
    %64 = vector.load %arg3[%c1_32, %c0_33] : memref<9x64xf32, #tpu.memory_space<vmem>>, vector<1x64xf32>
    %65 = vector.shape_cast %64 : vector<1x64xf32> to vector<64xf32>
    %66 = vector.shape_cast %65 : vector<64xf32> to vector<1x1x64xf32>
    %67 = vector.broadcast %66 : vector<1x1x64xf32> to vector<10x10x64xf32>
    %68 = arith.mulf %63, %67 : vector<10x10x64xf32>
    %69 = arith.addf %62, %68 : vector<10x10x64xf32>
    %c0_34 = arith.constant 0 : index
    %c2_35 = arith.constant 2 : index
    %c0_36 = arith.constant 0 : index
    %70 = vector.load %arg6[%c0_34, %c2_35, %c0_36] : memref<12x12x64xf32, #tpu.memory_space<vmem>>, vector<10x10x64xf32>
    %c2_37 = arith.constant 2 : index
    %c0_38 = arith.constant 0 : index
    %71 = vector.load %arg3[%c2_37, %c0_38] : memref<9x64xf32, #tpu.memory_space<vmem>>, vector<1x64xf32>
    %72 = vector.shape_cast %71 : vector<1x64xf32> to vector<64xf32>
    %73 = vector.shape_cast %72 : vector<64xf32> to vector<1x1x64xf32>
    %74 = vector.broadcast %73 : vector<1x1x64xf32> to vector<10x10x64xf32>
    %75 = arith.mulf %70, %74 : vector<10x10x64xf32>
    %76 = arith.addf %69, %75 : vector<10x10x64xf32>
    %c1_39 = arith.constant 1 : index
    %c0_40 = arith.constant 0 : index
    %c0_41 = arith.constant 0 : index
    %77 = vector.load %arg6[%c1_39, %c0_40, %c0_41] : memref<12x12x64xf32, #tpu.memory_space<vmem>>, vector<10x10x64xf32>
    %c3_42 = arith.constant 3 : index
    %c0_43 = arith.constant 0 : index
    %78 = vector.load %arg3[%c3_42, %c0_43] : memref<9x64xf32, #tpu.memory_space<vmem>>, vector<1x64xf32>
    %79 = vector.shape_cast %78 : vector<1x64xf32> to vector<64xf32>
    %80 = vector.shape_cast %79 : vector<64xf32> to vector<1x1x64xf32>
    %81 = vector.broadcast %80 : vector<1x1x64xf32> to vector<10x10x64xf32>
    %82 = arith.mulf %77, %81 : vector<10x10x64xf32>
    %83 = arith.addf %76, %82 : vector<10x10x64xf32>
    %c1_44 = arith.constant 1 : index
    %c1_45 = arith.constant 1 : index
    %c0_46 = arith.constant 0 : index
    %84 = vector.load %arg6[%c1_44, %c1_45, %c0_46] : memref<12x12x64xf32, #tpu.memory_space<vmem>>, vector<10x10x64xf32>
    %c4_47 = arith.constant 4 : index
    %c0_48 = arith.constant 0 : index
    %85 = vector.load %arg3[%c4_47, %c0_48] : memref<9x64xf32, #tpu.memory_space<vmem>>, vector<1x64xf32>
    %86 = vector.shape_cast %85 : vector<1x64xf32> to vector<64xf32>
    %87 = vector.shape_cast %86 : vector<64xf32> to vector<1x1x64xf32>
    %88 = vector.broadcast %87 : vector<1x1x64xf32> to vector<10x10x64xf32>
    %89 = arith.mulf %84, %88 : vector<10x10x64xf32>
    %90 = arith.addf %83, %89 : vector<10x10x64xf32>
    %c1_49 = arith.constant 1 : index
    %c2_50 = arith.constant 2 : index
    %c0_51 = arith.constant 0 : index
    %91 = vector.load %arg6[%c1_49, %c2_50, %c0_51] : memref<12x12x64xf32, #tpu.memory_space<vmem>>, vector<10x10x64xf32>
    %c5_52 = arith.constant 5 : index
    %c0_53 = arith.constant 0 : index
    %92 = vector.load %arg3[%c5_52, %c0_53] : memref<9x64xf32, #tpu.memory_space<vmem>>, vector<1x64xf32>
    %93 = vector.shape_cast %92 : vector<1x64xf32> to vector<64xf32>
    %94 = vector.shape_cast %93 : vector<64xf32> to vector<1x1x64xf32>
    %95 = vector.broadcast %94 : vector<1x1x64xf32> to vector<10x10x64xf32>
    %96 = arith.mulf %91, %95 : vector<10x10x64xf32>
    %97 = arith.addf %90, %96 : vector<10x10x64xf32>
    %c2_54 = arith.constant 2 : index
    %c0_55 = arith.constant 0 : index
    %c0_56 = arith.constant 0 : index
    %98 = vector.load %arg6[%c2_54, %c0_55, %c0_56] : memref<12x12x64xf32, #tpu.memory_space<vmem>>, vector<10x10x64xf32>
    %c6_57 = arith.constant 6 : index
    %c0_58 = arith.constant 0 : index
    %99 = vector.load %arg3[%c6_57, %c0_58] : memref<9x64xf32, #tpu.memory_space<vmem>>, vector<1x64xf32>
    %100 = vector.shape_cast %99 : vector<1x64xf32> to vector<64xf32>
    %101 = vector.shape_cast %100 : vector<64xf32> to vector<1x1x64xf32>
    %102 = vector.broadcast %101 : vector<1x1x64xf32> to vector<10x10x64xf32>
    %103 = arith.mulf %98, %102 : vector<10x10x64xf32>
    %104 = arith.addf %97, %103 : vector<10x10x64xf32>
    %c2_59 = arith.constant 2 : index
    %c1_60 = arith.constant 1 : index
    %c0_61 = arith.constant 0 : index
    %105 = vector.load %arg6[%c2_59, %c1_60, %c0_61] : memref<12x12x64xf32, #tpu.memory_space<vmem>>, vector<10x10x64xf32>
    %c7_62 = arith.constant 7 : index
    %c0_63 = arith.constant 0 : index
    %106 = vector.load %arg3[%c7_62, %c0_63] : memref<9x64xf32, #tpu.memory_space<vmem>>, vector<1x64xf32>
    %107 = vector.shape_cast %106 : vector<1x64xf32> to vector<64xf32>
    %108 = vector.shape_cast %107 : vector<64xf32> to vector<1x1x64xf32>
    %109 = vector.broadcast %108 : vector<1x1x64xf32> to vector<10x10x64xf32>
    %110 = arith.mulf %105, %109 : vector<10x10x64xf32>
    %111 = arith.addf %104, %110 : vector<10x10x64xf32>
    %c2_64 = arith.constant 2 : index
    %c2_65 = arith.constant 2 : index
    %c0_66 = arith.constant 0 : index
    %112 = vector.load %arg6[%c2_64, %c2_65, %c0_66] : memref<12x12x64xf32, #tpu.memory_space<vmem>>, vector<10x10x64xf32>
    %c8_67 = arith.constant 8 : index
    %c0_68 = arith.constant 0 : index
    %113 = vector.load %arg3[%c8_67, %c0_68] : memref<9x64xf32, #tpu.memory_space<vmem>>, vector<1x64xf32>
    %114 = vector.shape_cast %113 : vector<1x64xf32> to vector<64xf32>
    %115 = vector.shape_cast %114 : vector<64xf32> to vector<1x1x64xf32>
    %116 = vector.broadcast %115 : vector<1x1x64xf32> to vector<10x10x64xf32>
    %117 = arith.mulf %112, %116 : vector<10x10x64xf32>
    %118 = arith.addf %111, %117 : vector<10x10x64xf32>
    %cst_69 = arith.constant dense<0.000000e+00> : vector<10x10xf32>
    %119 = vector.multi_reduction <add>, %118, %cst_69 [2] : vector<10x10x64xf32> to vector<10x10xf32>
    %c0_70 = arith.constant 0 : index
    %c0_71 = arith.constant 0 : index
    %120 = vector.load %arg4[%c0_70, %c0_71] : memref<1x1xf32, #tpu.memory_space<vmem>>, vector<1x1xf32>
    %121 = vector.broadcast %120 : vector<1x1xf32> to vector<10x10xf32>
    %122 = arith.addf %119, %121 : vector<10x10xf32>
    %c0_72 = arith.constant 0 : index
    %c0_73 = arith.constant 0 : index
    %123 = vector.load %arg5[%c0_72, %c0_73] : memref<10x10xf32, #tpu.memory_space<vmem>>, vector<10x10xf32>
    tpu.vector_store %arg5[%c0_72, %c0_73], %122 {strides = array<i32>} : memref<10x10xf32, #tpu.memory_space<vmem>>, vector<10x10xf32>,
    return
  }
}

</mosaic_0001>

<llo_original>
// kernel: model_forward.1
$region0: #{model_forward.1}
  #allocation0 [shape = 'u32[]', space=smem, size = 0x4, offset = 0x4, fixed_abs, tag = 'smem constant byte address 0x4 - core index']
  #allocation1 [shape = 'u32[144,128]{1,0:T(1,128)}', space=vmem, size = 0x12000, scoped, tag = 'internal scratch']
  #allocation2 [shape = 'f32[12,12,64]{2,1,0:T(8,128)}', space=vmem, size = 0x18000, scoped, tag = 'scratch operand']
  #allocation3 [shape = 'f32[1,1]{1,0:T(1,128)S(1)}', space=vmem, size = 0x200, scoped, tag = 'scoped memory for model_forward.1']
  %s0 = inlined_call_operand.vmem [shape: f32[576,9], index: 0, kind: input, shape index: {}]
  %s1 = inlined_call_operand.vmem [shape: f32[9,64], index: 1, kind: input, shape index: {}]
  %s2 = inlined_call_operand.vmem [shape: f32[1,64], index: 2, kind: input, shape index: {}]
  %s3 = inlined_call_operand.vmem [shape: f32[9,64], index: 3, kind: input, shape index: {}]
  %s4 = inlined_call_operand.<no memory space> [shape: f32[1,1], index: 4, kind: input, shape index: {}]
  %s5 = inlined_call_operand.vmem [shape: f32[10,10], index: 5, kind: output, shape index: {}]
  %s6 = sld [smem:[#allocation0]]
  $region30: #{model_forward.1} parent=0
    _
  %s8 = ssub.s32 1, %s6
  %s9 = scalar_select 0, %s8, %s6
  %v10 = vstv %s4
  %11 = vst [vmem:[#allocation3] sm:$0x1] %v10
  // Predicated region
  $region2: #{model_forward.1} parent=0 // pred_check
    _
  $region3: #{model_forward.1} parent=0 // pred_check_branch
    %13 = sbr.rel (0) target = $region5
  $region4: #{model_forward.1} parent=0 // pred_region
    _
  $region5: #{model_forward.1} parent=0 // pred_fallthru
    _
  // Predicated region
  $region6: #{model_forward.1} parent=0 // pred_check
    _
  $region7: #{model_forward.1} parent=0 // pred_check_branch
    %15 = sbr.rel (0) target = $region9
  $region8: #{model_forward.1} parent=0 // pred_region
    _
  $region9: #{model_forward.1} parent=0 // pred_fallthru
    _
  // Predicated region
  $region10: #{model_forward.1} parent=0 // pred_check
    _
  $region11: #{model_forward.1} parent=0 // pred_check_branch
    %17 = sbr.rel (0) target = $region13
  $region12: #{model_forward.1} parent=0 // pred_region
    _
  $region13: #{model_forward.1} parent=0 // pred_fallthru
    _
  // Predicated region
  $region14: #{model_forward.1} parent=0 // pred_check
    _
  $region15: #{model_forward.1} parent=0 // pred_check_branch
    %19 = sbr.rel (0) target = $region17
  $region16: #{model_forward.1} parent=0 // pred_region
    _
  $region17: #{model_forward.1} parent=0 // pred_fallthru
    _
  // Predicated region
  $region18: #{model_forward.1} parent=0 // pred_check
    _
  $region19: #{model_forward.1} parent=0 // pred_check_branch
    %21 = sbr.rel (0) target = $region21
  $region20: #{model_forward.1} parent=0 // pred_region
    _
  $region21: #{model_forward.1} parent=0 // pred_fallthru
    _
  %v22 = vld [vmem:[%s0] sm:$0xff]
  %v23 = vld [vmem:[%s0 + $0x8] sm:$0xff]
  %v24 = vld [vmem:[%s0 + $0x10] sm:$0xff]
  %v25 = vld [vmem:[%s0 + $0x18] sm:$0xff]
  %v26 = vld [vmem:[%s0 + $0x20] sm:$0xff]
  %v27 = vld [vmem:[%s0 + $0x28] sm:$0xff]
  %v28 = vld [vmem:[%s0 + $0x30] sm:$0xff]
  %v29 = vld [vmem:[%s0 + $0x38] sm:$0xff]
  %v30 = vld [vmem:[%s0 + $0x40] sm:$0xff]
  %v31 = vld [vmem:[%s0 + $0x48] sm:$0xff]
  %v32 = vld [vmem:[%s0 + $0x50] sm:$0xff]
  %v33 = vld [vmem:[%s0 + $0x58] sm:$0xff]
  %v34 = vld [vmem:[%s0 + $0x60] sm:$0xff]
  %v35 = vld [vmem:[%s0 + $0x68] sm:$0xff]
  %v36 = vld [vmem:[%s0 + $0x70] sm:$0xff]
  %v37 = vld [vmem:[%s0 + $0x78] sm:$0xff]
  %v38 = vld [vmem:[%s0 + $0x80] sm:$0xff]
  %v39 = vld [vmem:[%s0 + $0x88] sm:$0xff]
  %v40 = vld [vmem:[%s0 + $0x90] sm:$0xff]
  %v41 = vld [vmem:[%s0 + $0x98] sm:$0xff]
  %v42 = vld [vmem:[%s0 + $0xa0] sm:$0xff]
  %v43 = vld [vmem:[%s0 + $0xa8] sm:$0xff]
  %v44 = vld [vmem:[%s0 + $0xb0] sm:$0xff]
  %v45 = vld [vmem:[%s0 + $0xb8] sm:$0xff]
  %v46 = vld [vmem:[%s0 + $0xc0] sm:$0xff]
  %v47 = vld [vmem:[%s0 + $0xc8] sm:$0xff]
  %v48 = vld [vmem:[%s0 + $0xd0] sm:$0xff]
  %v49 = vld [vmem:[%s0 + $0xd8] sm:$0xff]
  %v50 = vld [vmem:[%s0 + $0xe0] sm:$0xff]
  %v51 = vld [vmem:[%s0 + $0xe8] sm:$0xff]
  %v52 = vld [vmem:[%s0 + $0xf0] sm:$0xff]
  %v53 = vld [vmem:[%s0 + $0xf8] sm:$0xff]
  %v54 = vld [vmem:[%s0 + $0x100] sm:$0xff]
  %v55 = vld [vmem:[%s0 + $0x108] sm:$0xff]
  %v56 = vld [vmem:[%s0 + $0x110] sm:$0xff]
  %v57 = vld [vmem:[%s0 + $0x118] sm:$0xff]
  %v58 = vld [vmem:[%s0 + $0x120] sm:$0xff]
  %v59 = vld [vmem:[%s0 + $0x128] sm:$0xff]
  %v60 = vld [vmem:[%s0 + $0x130] sm:$0xff]
  %v61 = vld [vmem:[%s0 + $0x138] sm:$0xff]
  %v62 = vld [vmem:[%s0 + $0x140] sm:$0xff]
  %v63 = vld [vmem:[%s0 + $0x148] sm:$0xff]
  %v64 = vld [vmem:[%s0 + $0x150] sm:$0xff]
  %v65 = vld [vmem:[%s0 + $0x158] sm:$0xff]
  %v66 = vld [vmem:[%s0 + $0x160] sm:$0xff]
  %v67 = vld [vmem:[%s0 + $0x168] sm:$0xff]
  %v68 = vld [vmem:[%s0 + $0x170] sm:$0xff]
  %v69 = vld [vmem:[%s0 + $0x178] sm:$0xff]
  %v70 = vld [vmem:[%s0 + $0x180] sm:$0xff]
  %v71 = vld [vmem:[%s0 + $0x188] sm:$0xff]
  %v72 = vld [vmem:[%s0 + $0x190] sm:$0xff]
  %v73 = vld [vmem:[%s0 + $0x198] sm:$0xff]
  %v74 = vld [vmem:[%s0 + $0x1a0] sm:$0xff]
  %v75 = vld [vmem:[%s0 + $0x1a8] sm:$0xff]
  %v76 = vld [vmem:[%s0 + $0x1b0] sm:$0xff]
  %v77 = vld [vmem:[%s0 + $0x1b8] sm:$0xff]
  %v78 = vld [vmem:[%s0 + $0x1c0] sm:$0xff]
  %v79 = vld [vmem:[%s0 + $0x1c8] sm:$0xff]
  %v80 = vld [vmem:[%s0 + $0x1d0] sm:$0xff]
  %v81 = vld [vmem:[%s0 + $0x1d8] sm:$0xff]
  %v82 = vld [vmem:[%s0 + $0x1e0] sm:$0xff]
  %v83 = vld [vmem:[%s0 + $0x1e8] sm:$0xff]
  %v84 = vld [vmem:[%s0 + $0x1f0] sm:$0xff]
  %v85 = vld [vmem:[%s0 + $0x1f8] sm:$0xff]
  %v86 = vld [vmem:[%s0 + $0x200] sm:$0xff]
  %v87 = vld [vmem:[%s0 + $0x208] sm:$0xff]
  %v88 = vld [vmem:[%s0 + $0x210] sm:$0xff]
  %v89 = vld [vmem:[%s0 + $0x218] sm:$0xff]
  %v90 = vld [vmem:[%s0 + $0x220] sm:$0xff]
  %v91 = vld [vmem:[%s0 + $0x228] sm:$0xff]
  %v92 = vld [vmem:[%s0 + $0x230] sm:$0xff]
  %v93 = vld [vmem:[%s0 + $0x238] sm:$0xff]
  %v94 = vld [vmem:[%s1] sm:$0xff]
  %v95 = vld [vmem:[%s1 + $0x8] sm:$0x1]
  %v96 = vld [vmem:[%s2] sm:$0x1]
  %v98 = vlaneseq
  %v99 = vshrl.u32 %v98, 7
  %v100 = vsub.s32 0, %v99
  %v101 = vrot.slane %v96, %v100
  %vm103 = vcmask 72704
  %v105 = vsel %vm103, %v22, 0
  %v108 = vsel %vm103, %v23, 0
  %v111 = vsel %vm103, %v24, 0
  %v114 = vsel %vm103, %v25, 0
  %v117 = vsel %vm103, %v26, 0
  %v120 = vsel %vm103, %v27, 0
  %v123 = vsel %vm103, %v28, 0
  %v126 = vsel %vm103, %v29, 0
  %v129 = vsel %vm103, %v30, 0
  %v132 = vsel %vm103, %v31, 0
  %v135 = vsel %vm103, %v32, 0
  %v138 = vsel %vm103, %v33, 0
  %v141 = vsel %vm103, %v34, 0
  %v144 = vsel %vm103, %v35, 0
  %v147 = vsel %vm103, %v36, 0
  %v150 = vsel %vm103, %v37, 0
  %v153 = vsel %vm103, %v38, 0
  %v156 = vsel %vm103, %v39, 0
  %v159 = vsel %vm103, %v40, 0
  %v162 = vsel %vm103, %v41, 0
  %v165 = vsel %vm103, %v42, 0
  %v168 = vsel %vm103, %v43, 0
  %v171 = vsel %vm103, %v44, 0
  %v174 = vsel %vm103, %v45, 0
  %v177 = vsel %vm103, %v46, 0
  %v180 = vsel %vm103, %v47, 0
  %v183 = vsel %vm103, %v48, 0
  %v186 = vsel %vm103, %v49, 0
  %v189 = vsel %vm103, %v50, 0
  %v192 = vsel %vm103, %v51, 0
  %v195 = vsel %vm103, %v52, 0
  %v198 = vsel %vm103, %v53, 0
  %v201 = vsel %vm103, %v54, 0
  %v204 = vsel %vm103, %v55, 0
  %v207 = vsel %vm103, %v56, 0
  %v210 = vsel %vm103, %v57, 0
  %v213 = vsel %vm103, %v58, 0
  %v216 = vsel %vm103, %v59, 0
  %v219 = vsel %vm103, %v60, 0
  %v222 = vsel %vm103, %v61, 0
  %v225 = vsel %vm103, %v62, 0
  %v228 = vsel %vm103, %v63, 0
  %v231 = vsel %vm103, %v64, 0
  %v234 = vsel %vm103, %v65, 0
  %v237 = vsel %vm103, %v66, 0
  %v240 = vsel %vm103, %v67, 0
  %v243 = vsel %vm103, %v68, 0
  %v246 = vsel %vm103, %v69, 0
  %v249 = vsel %vm103, %v70, 0
  %v252 = vsel %vm103, %v71, 0
  %v255 = vsel %vm103, %v72, 0
  %v258 = vsel %vm103, %v73, 0
  %v261 = vsel %vm103, %v74, 0
  %v264 = vsel %vm103, %v75, 0
  %v267 = vsel %vm103, %v76, 0
  %v270 = vsel %vm103, %v77, 0
  %v273 = vsel %vm103, %v78, 0
  %v276 = vsel %vm103, %v79, 0
  %v279 = vsel %vm103, %v80, 0
  %v282 = vsel %vm103, %v81, 0
  %v285 = vsel %vm103, %v82, 0
  %v288 = vsel %vm103, %v83, 0
  %v291 = vsel %vm103, %v84, 0
  %v294 = vsel %vm103, %v85, 0
  %v297 = vsel %vm103, %v86, 0
  %v300 = vsel %vm103, %v87, 0
  %v303 = vsel %vm103, %v88, 0
  %v306 = vsel %vm103, %v89, 0
  %v309 = vsel %vm103, %v90, 0
  %v312 = vsel %vm103, %v91, 0
  %v315 = vsel %vm103, %v92, 0
  %v318 = vsel %vm103, %v93, 0
  %vm320 = vcmask 1040384
  %v322 = vsel %vm320, %v95, 0
  %324 = vmatprep.subr.mxu0 0.0
  %325 = vmatpush1.msra.mxu0 %v94
  %326 = vmatprep.subr.mxu0 0.0
  %327 = vmatpush1.msra.mxu0 %v322
  %328 = vmatprep.subr.mxu0 0.0
  %329 = vmatpush1.msra.mxu0 0.0
  %330 = vmatprep.subr.mxu0 0.0
  %331 = vmatpush1.msra.mxu0 0.0
  %332 = vmatprep.subr.mxu0 0.0
  %333 = vmatpush1.msra.mxu0 0.0
  %334 = vmatprep.subr.mxu0 0.0
  %335 = vmatpush1.msra.mxu0 0.0
  %336 = vmatprep.subr.mxu0 0.0
  %337 = vmatpush1.msra.mxu0 0.0
  %338 = vmatprep.subr.mxu0 0.0
  %339 = vmatpush1.msra.mxu0 0.0
  %340 = vmatprep.subr.mxu0 0.0
  %341 = vmatpush1.msra.mxu0 0.0
  %342 = vmatprep.subr.mxu0 0.0
  %343 = vmatpush1.msra.mxu0 0.0
  %344 = vmatprep.subr.mxu0 0.0
  %345 = vmatpush1.msra.mxu0 0.0
  %346 = vmatprep.subr.mxu0 0.0
  %347 = vmatpush1.msra.mxu0 0.0
  %348 = vmatprep.subr.mxu0 0.0
  %349 = vmatpush1.msra.mxu0 0.0
  %350 = vmatprep.subr.mxu0 0.0
  %351 = vmatpush1.msra.mxu0 0.0
  %352 = vmatprep.subr.mxu0 0.0
  %353 = vmatpush1.msra.mxu0 0.0
  %354 = vmatprep.subr.mxu0 0.0
  %355 = vmatpush1.msra.mxu0 0.0
  %356 = vmatprep.subr.mxu0 0.0
  %357 = vmatpush1.msra.mxu0 0.0
  %358 = vmatprep.subr.mxu0 0.0
  %359 = vmatpush1.msra.mxu0 0.0
  %360 = vmatprep.subr.mxu0 0.0
  %361 = vmatpush1.msra.mxu0 0.0
  %362 = vmatprep.subr.mxu0 0.0
  %363 = vmatpush1.msra.mxu0 0.0
  %364 = vmatprep.subr.mxu0 0.0
  %365 = vmatpush1.msra.mxu0 0.0
  %366 = vmatprep.subr.mxu0 0.0
  %367 = vmatpush1.msra.mxu0 0.0
  %368 = vmatprep.subr.mxu0 0.0
  %369 = vmatpush1.msra.mxu0 0.0
  %370 = vmatprep.subr.mxu0 0.0
  %371 = vmatpush1.msra.mxu0 0.0
  %372 = vmatprep.subr.mxu0 0.0
  %373 = vmatpush1.msra.mxu0 0.0
  %374 = vmatprep.subr.mxu0 0.0
  %375 = vmatpush1.msra.mxu0 0.0
  %376 = vmatprep.subr.mxu0 0.0
  %377 = vmatpush1.msra.mxu0 0.0
  %378 = vmatprep.subr.mxu0 0.0
  %379 = vmatpush1.msra.mxu0 0.0
  %380 = vmatprep.subr.mxu0 0.0
  %381 = vmatpush1.msra.mxu0 0.0
  %382 = vmatprep.subr.mxu0 0.0
  %383 = vmatpush1.msra.mxu0 0.0
  %384 = vmatprep.subr.mxu0 0.0
  %385 = vmatpush1.msra.mxu0 0.0
  %386 = vmatprep.subr.mxu0 0.0
  %387 = vmatpush1.msra.mxu0 0.0
  %388 = vmatprep.mubr.f32.mxu0 0.0
  %389 = vmatmul.mubr.f32.gmra.mrb[0].mxu0 %v105
  %v390 = vpop.f32.mrb[0].mxu0
  %v391 = vadd.f32 %v101, %v390
  %v392 = vpop.f32.mrb[0].mxu0
  %393 = vmatprep.mubr.f32.mxu0 0.0
  %394 = vmatmul.mubr.f32.gmra.mrb[0].mxu0 %v108
  %v395 = vpop.f32.mrb[0].mxu0
  %v396 = vadd.f32 %v101, %v395
  %v397 = vpop.f32.mrb[0].mxu0
  %398 = vmatprep.mubr.f32.mxu0 0.0
  %399 = vmatmul.mubr.f32.gmra.mrb[0].mxu0 %v111
  %v400 = vpop.f32.mrb[0].mxu0
  %v401 = vadd.f32 %v101, %v400
  %v402 = vpop.f32.mrb[0].mxu0
  %403 = vmatprep.mubr.f32.mxu0 0.0
  %404 = vmatmul.mubr.f32.gmra.mrb[0].mxu0 %v114
  %v405 = vpop.f32.mrb[0].mxu0
  %v406 = vadd.f32 %v101, %v405
  %v407 = vpop.f32.mrb[0].mxu0
  %408 = vmatprep.mubr.f32.mxu0 0.0
  %409 = vmatmul.mubr.f32.gmra.mrb[0].mxu0 %v117
  %v410 = vpop.f32.mrb[0].mxu0
  %v411 = vadd.f32 %v101, %v410
  %v412 = vpop.f32.mrb[0].mxu0
  %413 = vmatprep.mubr.f32.mxu0 0.0
  %414 = vmatmul.mubr.f32.gmra.mrb[0].mxu0 %v120
  %v415 = vpop.f32.mrb[0].mxu0
  %v416 = vadd.f32 %v101, %v415
  %v417 = vpop.f32.mrb[0].mxu0
  %418 = vmatprep.mubr.f32.mxu0 0.0
  %419 = vmatmul.mubr.f32.gmra.mrb[0].mxu0 %v123
  %v420 = vpop.f32.mrb[0].mxu0
  %v421 = vadd.f32 %v101, %v420
  %v422 = vpop.f32.mrb[0].mxu0
  %423 = vmatprep.mubr.f32.mxu0 0.0
  %424 = vmatmul.mubr.f32.gmra.mrb[0].mxu0 %v126
  %v425 = vpop.f32.mrb[0].mxu0
  %v426 = vadd.f32 %v101, %v425
  %v427 = vpop.f32.mrb[0].mxu0
  %428 = vmatprep.mubr.f32.mxu0 0.0
  %429 = vmatmul.mubr.f32.gmra.mrb[0].mxu0 %v129
  %v430 = vpop.f32.mrb[0].mxu0
  %v431 = vadd.f32 %v101, %v430
  %v432 = vpop.f32.mrb[0].mxu0
  %433 = vmatprep.mubr.f32.mxu0 0.0
  %434 = vmatmul.mubr.f32.gmra.mrb[0].mxu0 %v132
  %v435 = vpop.f32.mrb[0].mxu0
  %v436 = vadd.f32 %v101, %v435
  %v437 = vpop.f32.mrb[0].mxu0
  %438 = vmatprep.mubr.f32.mxu0 0.0
  %439 = vmatmul.mubr.f32.gmra.mrb[0].mxu0 %v135
  %v440 = vpop.f32.mrb[0].mxu0
  %v441 = vadd.f32 %v101, %v440
  %v442 = vpop.f32.mrb[0].mxu0
  %443 = vmatprep.mubr.f32.mxu0 0.0
  %444 = vmatmul.mubr.f32.gmra.mrb[0].mxu0 %v138
  %v445 = vpop.f32.mrb[0].mxu0
  %v446 = vadd.f32 %v101, %v445
  %v447 = vpop.f32.mrb[0].mxu0
  %448 = vmatprep.mubr.f32.mxu0 0.0
  %449 = vmatmul.mubr.f32.gmra.mrb[0].mxu0 %v141
  %v450 = vpop.f32.mrb[0].mxu0
  %v451 = vadd.f32 %v101, %v450
  %v452 = vpop.f32.mrb[0].mxu0
  %453 = vmatprep.mubr.f32.mxu0 0.0
  %454 = vmatmul.mubr.f32.gmra.mrb[0].mxu0 %v144
  %v455 = vpop.f32.mrb[0].mxu0
  %v456 = vadd.f32 %v101, %v455
  %v457 = vpop.f32.mrb[0].mxu0
  %458 = vmatprep.mubr.f32.mxu0 0.0
  %459 = vmatmul.mubr.f32.gmra.mrb[0].mxu0 %v147
  %v460 = vpop.f32.mrb[0].mxu0
  %v461 = vadd.f32 %v101, %v460
  %v462 = vpop.f32.mrb[0].mxu0
  %463 = vmatprep.mubr.f32.mxu0 0.0
  %464 = vmatmul.mubr.f32.gmra.mrb[0].mxu0 %v150
  %v465 = vpop.f32.mrb[0].mxu0
  %v466 = vadd.f32 %v101, %v465
  %v467 = vpop.f32.mrb[0].mxu0
  %468 = vmatprep.mubr.f32.mxu0 0.0
  %469 = vmatmul.mubr.f32.gmra.mrb[0].mxu0 %v153
  %v470 = vpop.f32.mrb[0].mxu0
  %v471 = vadd.f32 %v101, %v470
  %v472 = vpop.f32.mrb[0].mxu0
  %473 = vmatprep.mubr.f32.mxu0 0.0
  %474 = vmatmul.mubr.f32.gmra.mrb[0].mxu0 %v156
  %v475 = vpop.f32.mrb[0].mxu0
  %v476 = vadd.f32 %v101, %v475
  %v477 = vpop.f32.mrb[0].mxu0
  %478 = vmatprep.mubr.f32.mxu0 0.0
  %479 = vmatmul.mubr.f32.gmra.mrb[0].mxu0 %v159
  %v480 = vpop.f32.mrb[0].mxu0
  %v481 = vadd.f32 %v101, %v480
  %v482 = vpop.f32.mrb[0].mxu0
  %483 = vmatprep.mubr.f32.mxu0 0.0
  %484 = vmatmul.mubr.f32.gmra.mrb[0].mxu0 %v162
  %v485 = vpop.f32.mrb[0].mxu0
  %v486 = vadd.f32 %v101, %v485
  %v487 = vpop.f32.mrb[0].mxu0
  %488 = vmatprep.mubr.f32.mxu0 0.0
  %489 = vmatmul.mubr.f32.gmra.mrb[0].mxu0 %v165
  %v490 = vpop.f32.mrb[0].mxu0
  %v491 = vadd.f32 %v101, %v490
  %v492 = vpop.f32.mrb[0].mxu0
  %493 = vmatprep.mubr.f32.mxu0 0.0
  %494 = vmatmul.mubr.f32.gmra.mrb[0].mxu0 %v168
  %v495 = vpop.f32.mrb[0].mxu0
  %v496 = vadd.f32 %v101, %v495
  %v497 = vpop.f32.mrb[0].mxu0
  %498 = vmatprep.mubr.f32.mxu0 0.0
  %499 = vmatmul.mubr.f32.gmra.mrb[0].mxu0 %v171
  %v500 = vpop.f32.mrb[0].mxu0
  %v501 = vadd.f32 %v101, %v500
  %v502 = vpop.f32.mrb[0].mxu0
  %503 = vmatprep.mubr.f32.mxu0 0.0
  %504 = vmatmul.mubr.f32.gmra.mrb[0].mxu0 %v174
  %v505 = vpop.f32.mrb[0].mxu0
  %v506 = vadd.f32 %v101, %v505
  %v507 = vpop.f32.mrb[0].mxu0
  %508 = vmatprep.mubr.f32.mxu0 0.0
  %509 = vmatmul.mubr.f32.gmra.mrb[0].mxu0 %v177
  %v510 = vpop.f32.mrb[0].mxu0
  %v511 = vadd.f32 %v101, %v510
  %v512 = vpop.f32.mrb[0].mxu0
  %513 = vmatprep.mubr.f32.mxu0 0.0
  %514 = vmatmul.mubr.f32.gmra.mrb[0].mxu0 %v180
  %v515 = vpop.f32.mrb[0].mxu0
  %v516 = vadd.f32 %v101, %v515
  %v517 = vpop.f32.mrb[0].mxu0
  %518 = vmatprep.mubr.f32.mxu0 0.0
  %519 = vmatmul.mubr.f32.gmra.mrb[0].mxu0 %v183
  %v520 = vpop.f32.mrb[0].mxu0
  %v521 = vadd.f32 %v101, %v520
  %v522 = vpop.f32.mrb[0].mxu0
  %523 = vmatprep.mubr.f32.mxu0 0.0
  %524 = vmatmul.mubr.f32.gmra.mrb[0].mxu0 %v186
  %v525 = vpop.f32.mrb[0].mxu0
  %v526 = vadd.f32 %v101, %v525
  %v527 = vpop.f32.mrb[0].mxu0
  %528 = vmatprep.mubr.f32.mxu0 0.0
  %529 = vmatmul.mubr.f32.gmra.mrb[0].mxu0 %v189
  %v530 = vpop.f32.mrb[0].mxu0
  %v531 = vadd.f32 %v101, %v530
  %v532 = vpop.f32.mrb[0].mxu0
  %533 = vmatprep.mubr.f32.mxu0 0.0
  %534 = vmatmul.mubr.f32.gmra.mrb[0].mxu0 %v192
  %v535 = vpop.f32.mrb[0].mxu0
  %v536 = vadd.f32 %v101, %v535
  %v537 = vpop.f32.mrb[0].mxu0
  %538 = vmatprep.mubr.f32.mxu0 0.0
  %539 = vmatmul.mubr.f32.gmra.mrb[0].mxu0 %v195
  %v540 = vpop.f32.mrb[0].mxu0
  %v541 = vadd.f32 %v101, %v540
  %v542 = vpop.f32.mrb[0].mxu0
  %543 = vmatprep.mubr.f32.mxu0 0.0
  %544 = vmatmul.mubr.f32.gmra.mrb[0].mxu0 %v198
  %v545 = vpop.f32.mrb[0].mxu0
  %v546 = vadd.f32 %v101, %v545
  %v547 = vpop.f32.mrb[0].mxu0
  %548 = vmatprep.mubr.f32.mxu0 0.0
  %549 = vmatmul.mubr.f32.gmra.mrb[0].mxu0 %v201
  %v550 = vpop.f32.mrb[0].mxu0
  %v551 = vadd.f32 %v101, %v550
  %v552 = vpop.f32.mrb[0].mxu0
  %553 = vmatprep.mubr.f32.mxu0 0.0
  %554 = vmatmul.mubr.f32.gmra.mrb[0].mxu0 %v204
  %v555 = vpop.f32.mrb[0].mxu0
  %v556 = vadd.f32 %v101, %v555
  %v557 = vpop.f32.mrb[0].mxu0
  %558 = vmatprep.mubr.f32.mxu0 0.0
  %559 = vmatmul.mubr.f32.gmra.mrb[0].mxu0 %v207
  %v560 = vpop.f32.mrb[0].mxu0
  %v561 = vadd.f32 %v101, %v560
  %v562 = vpop.f32.mrb[0].mxu0
  %563 = vmatprep.mubr.f32.mxu0 0.0
  %564 = vmatmul.mubr.f32.gmra.mrb[0].mxu0 %v210
  %v565 = vpop.f32.mrb[0].mxu0
  %v566 = vadd.f32 %v101, %v565
  %v567 = vpop.f32.mrb[0].mxu0
  %568 = vmatprep.mubr.f32.mxu0 0.0
  %569 = vmatmul.mubr.f32.gmra.mrb[0].mxu0 %v213
  %v570 = vpop.f32.mrb[0].mxu0
  %v571 = vadd.f32 %v101, %v570
  %v572 = vpop.f32.mrb[0].mxu0
  %573 = vmatprep.mubr.f32.mxu0 0.0
  %574 = vmatmul.mubr.f32.gmra.mrb[0].mxu0 %v216
  %v575 = vpop.f32.mrb[0].mxu0
  %v576 = vadd.f32 %v101, %v575
  %v577 = vpop.f32.mrb[0].mxu0
  %578 = vmatprep.mubr.f32.mxu0 0.0
  %579 = vmatmul.mubr.f32.gmra.mrb[0].mxu0 %v219
  %v580 = vpop.f32.mrb[0].mxu0
  %v581 = vadd.f32 %v101, %v580
  %v582 = vpop.f32.mrb[0].mxu0
  %583 = vmatprep.mubr.f32.mxu0 0.0
  %584 = vmatmul.mubr.f32.gmra.mrb[0].mxu0 %v222
  %v585 = vpop.f32.mrb[0].mxu0
  %v586 = vadd.f32 %v101, %v585
  %v587 = vpop.f32.mrb[0].mxu0
  %588 = vmatprep.mubr.f32.mxu0 0.0
  %589 = vmatmul.mubr.f32.gmra.mrb[0].mxu0 %v225
  %v590 = vpop.f32.mrb[0].mxu0
  %v591 = vadd.f32 %v101, %v590
  %v592 = vpop.f32.mrb[0].mxu0
  %593 = vmatprep.mubr.f32.mxu0 0.0
  %594 = vmatmul.mubr.f32.gmra.mrb[0].mxu0 %v228
  %v595 = vpop.f32.mrb[0].mxu0
  %v596 = vadd.f32 %v101, %v595
  %v597 = vpop.f32.mrb[0].mxu0
  %598 = vmatprep.mubr.f32.mxu0 0.0
  %599 = vmatmul.mubr.f32.gmra.mrb[0].mxu0 %v231
  %v600 = vpop.f32.mrb[0].mxu0
  %v601 = vadd.f32 %v101, %v600
  %v602 = vpop.f32.mrb[0].mxu0
  %603 = vmatprep.mubr.f32.mxu0 0.0
  %604 = vmatmul.mubr.f32.gmra.mrb[0].mxu0 %v234
  %v605 = vpop.f32.mrb[0].mxu0
  %v606 = vadd.f32 %v101, %v605
  %v607 = vpop.f32.mrb[0].mxu0
  %608 = vmatprep.mubr.f32.mxu0 0.0
  %609 = vmatmul.mubr.f32.gmra.mrb[0].mxu0 %v237
  %v610 = vpop.f32.mrb[0].mxu0
  %v611 = vadd.f32 %v101, %v610
  %v612 = vpop.f32.mrb[0].mxu0
  %613 = vmatprep.mubr.f32.mxu0 0.0
  %614 = vmatmul.mubr.f32.gmra.mrb[0].mxu0 %v240
  %v615 = vpop.f32.mrb[0].mxu0
  %v616 = vadd.f32 %v101, %v615
  %v617 = vpop.f32.mrb[0].mxu0
  %618 = vmatprep.mubr.f32.mxu0 0.0
  %619 = vmatmul.mubr.f32.gmra.mrb[0].mxu0 %v243
  %v620 = vpop.f32.mrb[0].mxu0
  %v621 = vadd.f32 %v101, %v620
  %v622 = vpop.f32.mrb[0].mxu0
  %623 = vmatprep.mubr.f32.mxu0 0.0
  %624 = vmatmul.mubr.f32.gmra.mrb[0].mxu0 %v246
  %v625 = vpop.f32.mrb[0].mxu0
  %v626 = vadd.f32 %v101, %v625
  %v627 = vpop.f32.mrb[0].mxu0
  %628 = vmatprep.mubr.f32.mxu0 0.0
  %629 = vmatmul.mubr.f32.gmra.mrb[0].mxu0 %v249
  %v630 = vpop.f32.mrb[0].mxu0
  %v631 = vadd.f32 %v101, %v630
  %v632 = vpop.f32.mrb[0].mxu0
  %633 = vmatprep.mubr.f32.mxu0 0.0
  %634 = vmatmul.mubr.f32.gmra.mrb[0].mxu0 %v252
  %v635 = vpop.f32.mrb[0].mxu0
  %v636 = vadd.f32 %v101, %v635
  %v637 = vpop.f32.mrb[0].mxu0
  %638 = vmatprep.mubr.f32.mxu0 0.0
  %639 = vmatmul.mubr.f32.gmra.mrb[0].mxu0 %v255
  %v640 = vpop.f32.mrb[0].mxu0
  %v641 = vadd.f32 %v101, %v640
  %v642 = vpop.f32.mrb[0].mxu0
  %643 = vmatprep.mubr.f32.mxu0 0.0
  %644 = vmatmul.mubr.f32.gmra.mrb[0].mxu0 %v258
  %v645 = vpop.f32.mrb[0].mxu0
  %v646 = vadd.f32 %v101, %v645
  %v647 = vpop.f32.mrb[0].mxu0
  %648 = vmatprep.mubr.f32.mxu0 0.0
  %649 = vmatmul.mubr.f32.gmra.mrb[0].mxu0 %v261
  %v650 = vpop.f32.mrb[0].mxu0
  %v651 = vadd.f32 %v101, %v650
  %v652 = vpop.f32.mrb[0].mxu0
  %653 = vmatprep.mubr.f32.mxu0 0.0
  %654 = vmatmul.mubr.f32.gmra.mrb[0].mxu0 %v264
  %v655 = vpop.f32.mrb[0].mxu0
  %v656 = vadd.f32 %v101, %v655
  %v657 = vpop.f32.mrb[0].mxu0
  %658 = vmatprep.mubr.f32.mxu0 0.0
  %659 = vmatmul.mubr.f32.gmra.mrb[0].mxu0 %v267
  %v660 = vpop.f32.mrb[0].mxu0
  %v661 = vadd.f32 %v101, %v660
  %v662 = vpop.f32.mrb[0].mxu0
  %663 = vmatprep.mubr.f32.mxu0 0.0
  %664 = vmatmul.mubr.f32.gmra.mrb[0].mxu0 %v270
  %v665 = vpop.f32.mrb[0].mxu0
  %v666 = vadd.f32 %v101, %v665
  %v667 = vpop.f32.mrb[0].mxu0
  %668 = vmatprep.mubr.f32.mxu0 0.0
  %669 = vmatmul.mubr.f32.gmra.mrb[0].mxu0 %v273
  %v670 = vpop.f32.mrb[0].mxu0
  %v671 = vadd.f32 %v101, %v670
  %v672 = vpop.f32.mrb[0].mxu0
  %673 = vmatprep.mubr.f32.mxu0 0.0
  %674 = vmatmul.mubr.f32.gmra.mrb[0].mxu0 %v276
  %v675 = vpop.f32.mrb[0].mxu0
  %v676 = vadd.f32 %v101, %v675
  %v677 = vpop.f32.mrb[0].mxu0
  %678 = vmatprep.mubr.f32.mxu0 0.0
  %679 = vmatmul.mubr.f32.gmra.mrb[0].mxu0 %v279
  %v680 = vpop.f32.mrb[0].mxu0
  %v681 = vadd.f32 %v101, %v680
  %v682 = vpop.f32.mrb[0].mxu0
  %683 = vmatprep.mubr.f32.mxu0 0.0
  %684 = vmatmul.mubr.f32.gmra.mrb[0].mxu0 %v282
  %v685 = vpop.f32.mrb[0].mxu0
  %v686 = vadd.f32 %v101, %v685
  %v687 = vpop.f32.mrb[0].mxu0
  %688 = vmatprep.mubr.f32.mxu0 0.0
  %689 = vmatmul.mubr.f32.gmra.mrb[0].mxu0 %v285
  %v690 = vpop.f32.mrb[0].mxu0
  %v691 = vadd.f32 %v101, %v690
  %v692 = vpop.f32.mrb[0].mxu0
  %693 = vmatprep.mubr.f32.mxu0 0.0
  %694 = vmatmul.mubr.f32.gmra.mrb[0].mxu0 %v288
  %v695 = vpop.f32.mrb[0].mxu0
  %v696 = vadd.f32 %v101, %v695
  %v697 = vpop.f32.mrb[0].mxu0
  %698 = vmatprep.mubr.f32.mxu0 0.0
  %699 = vmatmul.mubr.f32.gmra.mrb[0].mxu0 %v291
  %v700 = vpop.f32.mrb[0].mxu0
  %v701 = vadd.f32 %v101, %v700
  %v702 = vpop.f32.mrb[0].mxu0
  %703 = vmatprep.mubr.f32.mxu0 0.0
  %704 = vmatmul.mubr.f32.gmra.mrb[0].mxu0 %v294
  %v705 = vpop.f32.mrb[0].mxu0
  %v706 = vadd.f32 %v101, %v705
  %v707 = vpop.f32.mrb[0].mxu0
  %708 = vmatprep.mubr.f32.mxu0 0.0
  %709 = vmatmul.mubr.f32.gmra.mrb[0].mxu0 %v297
  %v710 = vpop.f32.mrb[0].mxu0
  %v711 = vadd.f32 %v101, %v710
  %v712 = vpop.f32.mrb[0].mxu0
  %713 = vmatprep.mubr.f32.mxu0 0.0
  %714 = vmatmul.mubr.f32.gmra.mrb[0].mxu0 %v300
  %v715 = vpop.f32.mrb[0].mxu0
  %v716 = vadd.f32 %v101, %v715
  %v717 = vpop.f32.mrb[0].mxu0
  %718 = vmatprep.mubr.f32.mxu0 0.0
  %719 = vmatmul.mubr.f32.gmra.mrb[0].mxu0 %v303
  %v720 = vpop.f32.mrb[0].mxu0
  %v721 = vadd.f32 %v101, %v720
  %v722 = vpop.f32.mrb[0].mxu0
  %723 = vmatprep.mubr.f32.mxu0 0.0
  %724 = vmatmul.mubr.f32.gmra.mrb[0].mxu0 %v306
  %v725 = vpop.f32.mrb[0].mxu0
  %v726 = vadd.f32 %v101, %v725
  %v727 = vpop.f32.mrb[0].mxu0
  %728 = vmatprep.mubr.f32.mxu0 0.0
  %729 = vmatmul.mubr.f32.gmra.mrb[0].mxu0 %v309
  %v730 = vpop.f32.mrb[0].mxu0
  %v731 = vadd.f32 %v101, %v730
  %v732 = vpop.f32.mrb[0].mxu0
  %733 = vmatprep.mubr.f32.mxu0 0.0
  %734 = vmatmul.mubr.f32.gmra.mrb[0].mxu0 %v312
  %v735 = vpop.f32.mrb[0].mxu0
  %v736 = vadd.f32 %v101, %v735
  %v737 = vpop.f32.mrb[0].mxu0
  %738 = vmatprep.mubr.f32.mxu0 0.0
  %739 = vmatmul.mubr.f32.gmra.mrb[0].mxu0 %v315
  %v740 = vpop.f32.mrb[0].mxu0
  %v741 = vadd.f32 %v101, %v740
  %v742 = vpop.f32.mrb[0].mxu0
  %743 = vmatprep.mubr.f32.mxu0 0.0
  %744 = vmatmul.mubr.f32.gmra.mrb[0].mxu0 %v318
  %v745 = vpop.f32.mrb[0].mxu0
  %v746 = vadd.f32 %v101, %v745
  %v747 = vpop.f32.mrb[0].mxu0
  %748 = vdwg.mxu0
  %v749 = vmax.f32 %v391, %v431
  %v750 = vmax.f32 %v396, %v436
  %v751 = vmax.f32 %v401, %v441
  %v752 = vmax.f32 %v406, %v446
  %v753 = vmax.f32 %v411, %v451
  %v754 = vmax.f32 %v416, %v456
  %v755 = vmax.f32 %v421, %v461
  %v756 = vmax.f32 %v426, %v466
  %v757 = vmax.f32 %v749, %v471
  %v758 = vmax.f32 %v750, %v476
  %v759 = vmax.f32 %v751, %v481
  %v760 = vmax.f32 %v752, %v486
  %v761 = vmax.f32 %v753, %v491
  %v762 = vmax.f32 %v754, %v496
  %v763 = vmax.f32 %v755, %v501
  %v764 = vmax.f32 %v756, %v506
  %v765 = vmax.f32 %v757, %v511
  %v766 = vmax.f32 %v758, %v516
  %v767 = vmax.f32 %v759, %v521
  %v768 = vmax.f32 %v760, %v526
  %v769 = vmax.f32 %v761, %v531
  %v770 = vmax.f32 %v762, %v536
  %v771 = vmax.f32 %v763, %v541
  %v772 = vmax.f32 %v764, %v546
  %v773 = vmax.f32 %v765, %v551
  %v774 = vmax.f32 %v766, %v556
  %v775 = vmax.f32 %v767, %v561
  %v776 = vmax.f32 %v768, %v566
  %v777 = vmax.f32 %v769, %v571
  %v778 = vmax.f32 %v770, %v576
  %v779 = vmax.f32 %v771, %v581
  %v780 = vmax.f32 %v772, %v586
  %v781 = vmax.f32 %v773, %v591
  %v782 = vmax.f32 %v774, %v596
  %v783 = vmax.f32 %v775, %v601
  %v784 = vmax.f32 %v776, %v606
  %v785 = vmax.f32 %v777, %v611
  %v786 = vmax.f32 %v778, %v616
  %v787 = vmax.f32 %v779, %v621
  %v788 = vmax.f32 %v780, %v626
  %v789 = vmax.f32 %v781, %v631
  %v790 = vmax.f32 %v782, %v636
  %v791 = vmax.f32 %v783, %v641
  %v792 = vmax.f32 %v784, %v646
  %v793 = vmax.f32 %v785, %v651
  %v794 = vmax.f32 %v786, %v656
  %v795 = vmax.f32 %v787, %v661
  %v796 = vmax.f32 %v788, %v666
  %v797 = vmax.f32 %v789, %v671
  %v798 = vmax.f32 %v790, %v676
  %v799 = vmax.f32 %v791, %v681
  %v800 = vmax.f32 %v792, %v686
  %v801 = vmax.f32 %v793, %v691
  %v802 = vmax.f32 %v794, %v696
  %v803 = vmax.f32 %v795, %v701
  %v804 = vmax.f32 %v796, %v706
  %v805 = vmax.f32 %v797, %v711
  %v806 = vmax.f32 %v798, %v716
  %v807 = vmax.f32 %v799, %v721
  %v808 = vmax.f32 %v800, %v726
  %v809 = vmax.f32 %v801, %v731
  %v810 = vmax.f32 %v802, %v736
  %v811 = vmax.f32 %v803, %v741
  %v812 = vmax.f32 %v804, %v746
  %vm813 = vcmask 523264
  %814 = vst.msk [vmem:[#allocation2] sm:$0xff] %vm813, 0.0
  %vm815 = vcmask 519168
  %816 = vst.msk [vmem:[#allocation2 + $0x8] sm:$0xf] %vm815, 0.0
  %817 = vst.msk [vmem:[#allocation2 + $0x10] sm:$0xff] %vm813, 0.0
  %818 = vst.msk [vmem:[#allocation2 + $0x18] sm:$0xf] %vm815, 0.0
  %819 = vst.msk [vmem:[#allocation2 + $0x20] sm:$0xff] %vm813, 0.0
  %820 = vst.msk [vmem:[#allocation2 + $0x28] sm:$0xf] %vm815, 0.0
  %821 = vst.msk [vmem:[#allocation2 + $0x30] sm:$0xff] %vm813, 0.0
  %822 = vst.msk [vmem:[#allocation2 + $0x38] sm:$0xf] %vm815, 0.0
  %823 = vst.msk [vmem:[#allocation2 + $0x40] sm:$0xff] %vm813, 0.0
  %824 = vst.msk [vmem:[#allocation2 + $0x48] sm:$0xf] %vm815, 0.0
  %825 = vst.msk [vmem:[#allocation2 + $0x50] sm:$0xff] %vm813, 0.0
  %826 = vst.msk [vmem:[#allocation2 + $0x58] sm:$0xf] %vm815, 0.0
  %827 = vst.msk [vmem:[#allocation2 + $0x60] sm:$0xff] %vm813, 0.0
  %828 = vst.msk [vmem:[#allocation2 + $0x68] sm:$0xf] %vm815, 0.0
  %829 = vst.msk [vmem:[#allocation2 + $0x70] sm:$0xff] %vm813, 0.0
  %830 = vst.msk [vmem:[#allocation2 + $0x78] sm:$0xf] %vm815, 0.0
  %831 = vst.msk [vmem:[#allocation2 + $0x80] sm:$0xff] %vm813, 0.0
  %832 = vst.msk [vmem:[#allocation2 + $0x88] sm:$0xf] %vm815, 0.0
  %833 = vst.msk [vmem:[#allocation2 + $0x90] sm:$0xff] %vm813, 0.0
  %834 = vst.msk [vmem:[#allocation2 + $0x98] sm:$0xf] %vm815, 0.0
  %835 = vst.msk [vmem:[#allocation2 + $0xa0] sm:$0xff] %vm813, 0.0
  %836 = vst.msk [vmem:[#allocation2 + $0xa8] sm:$0xf] %vm815, 0.0
  %837 = vst.msk [vmem:[#allocation2 + $0xb0] sm:$0xff] %vm813, 0.0
  %838 = vst.msk [vmem:[#allocation2 + $0xb8] sm:$0xf] %vm815, 0.0
  %s839 = scalar_lea.vmem [#allocation2], 32
  %840 = vst.msk [vmem:[%s839 + $0x2] sm:$0xff] %vm813, %v805
  %s841 = scalar_lea.vmem [#allocation2], 48
  %842 = vst.msk [vmem:[%s841 + $0x2] sm:$0xff] %vm813, %v806
  %s843 = scalar_lea.vmem [#allocation2], 64
  %844 = vst.msk [vmem:[%s843 + $0x2] sm:$0xff] %vm813, %v807
  %s845 = scalar_lea.vmem [#allocation2], 80
  %846 = vst.msk [vmem:[%s845 + $0x2] sm:$0xff] %vm813, %v808
  %s847 = scalar_lea.vmem [#allocation2], 96
  %848 = vst.msk [vmem:[%s847 + $0x2] sm:$0xff] %vm813, %v809
  %s849 = scalar_lea.vmem [#allocation2], 112
  %850 = vst.msk [vmem:[%s849 + $0x2] sm:$0xff] %vm813, %v810
  %s851 = scalar_lea.vmem [#allocation2], 128
  %852 = vst.msk [vmem:[%s851 + $0x2] sm:$0xff] %vm813, %v811
  %s853 = scalar_lea.vmem [#allocation2], 144
  %854 = vst.msk [vmem:[%s853 + $0x2] sm:$0xff] %vm813, %v812
  %v855 = vld [vmem:[#allocation2] sm:$0xff]
  %v856 = vld [vmem:[#allocation2 + $0x8] sm:$0x3]
  %v857 = vld [vmem:[#allocation2 + $0x10] sm:$0xff]
  %v858 = vld [vmem:[#allocation2 + $0x18] sm:$0x3]
  %v859 = vld [vmem:[#allocation2 + $0x20] sm:$0xff]
  %v860 = vld [vmem:[#allocation2 + $0x28] sm:$0x3]
  %v861 = vld [vmem:[#allocation2 + $0x30] sm:$0xff]
  %v862 = vld [vmem:[#allocation2 + $0x38] sm:$0x3]
  %v863 = vld [vmem:[#allocation2 + $0x40] sm:$0xff]
  %v864 = vld [vmem:[#allocation2 + $0x48] sm:$0x3]
  %v865 = vld [vmem:[#allocation2 + $0x50] sm:$0xff]
  %v866 = vld [vmem:[#allocation2 + $0x58] sm:$0x3]
  %v867 = vld [vmem:[#allocation2 + $0x60] sm:$0xff]
  %v868 = vld [vmem:[#allocation2 + $0x68] sm:$0x3]
  %v869 = vld [vmem:[#allocation2 + $0x70] sm:$0xff]
  %v870 = vld [vmem:[#allocation2 + $0x78] sm:$0x3]
  %v871 = vld [vmem:[#allocation2 + $0x80] sm:$0xff]
  %v872 = vld [vmem:[#allocation2 + $0x88] sm:$0x3]
  %v873 = vld [vmem:[#allocation2 + $0x90] sm:$0xff]
  %v874 = vld [vmem:[#allocation2 + $0x98] sm:$0x3]
  %v875 = vld [vmem:[%s3] sm:$0x1]
  %v876 = vlaneseq
  %v877 = vshrl.u32 %v876, 7
  %v878 = vsub.s32 0, %v877
  %v879 = vrot.slane %v875, %v878
  %v880 = vmul.f32 %v855, %v879
  %v881 = vmul.f32 %v856, %v879
  %v882 = vmul.f32 %v857, %v879
  %v883 = vmul.f32 %v858, %v879
  %v884 = vmul.f32 %v859, %v879
  %v885 = vmul.f32 %v860, %v879
  %v886 = vmul.f32 %v861, %v879
  %v887 = vmul.f32 %v862, %v879
  %v888 = vmul.f32 %v863, %v879
  %v889 = vmul.f32 %v864, %v879
  %v890 = vmul.f32 %v865, %v879
  %v891 = vmul.f32 %v866, %v879
  %v892 = vmul.f32 %v867, %v879
  %v893 = vmul.f32 %v868, %v879
  %v894 = vmul.f32 %v869, %v879
  %v895 = vmul.f32 %v870, %v879
  %v896 = vmul.f32 %v871, %v879
  %v897 = vmul.f32 %v872, %v879
  %v898 = vmul.f32 %v873, %v879
  %v899 = vmul.f32 %v874, %v879
  %v900 = vld [vmem:[#allocation2 + $0x1] sm:$0xff]
  %v901 = vld [vmem:[#allocation2 + $0x9] sm:$0x3]
  %v902 = vld [vmem:[#allocation2 + $0x11] sm:$0xff]
  %v903 = vld [vmem:[#allocation2 + $0x19] sm:$0x3]
  %v904 = vld [vmem:[#allocation2 + $0x21] sm:$0xff]
  %v905 = vld [vmem:[#allocation2 + $0x29] sm:$0x3]
  %v906 = vld [vmem:[#allocation2 + $0x31] sm:$0xff]
  %v907 = vld [vmem:[#allocation2 + $0x39] sm:$0x3]
  %v908 = vld [vmem:[#allocation2 + $0x41] sm:$0xff]
  %v909 = vld [vmem:[#allocation2 + $0x49] sm:$0x3]
  %v910 = vld [vmem:[#allocation2 + $0x51] sm:$0xff]
  %v911 = vld [vmem:[#allocation2 + $0x59] sm:$0x3]
  %v912 = vld [vmem:[#allocation2 + $0x61] sm:$0xff]
  %v913 = vld [vmem:[#allocation2 + $0x69] sm:$0x3]
  %v914 = vld [vmem:[#allocation2 + $0x71] sm:$0xff]
  %v915 = vld [vmem:[#allocation2 + $0x79] sm:$0x3]
  %v916 = vld [vmem:[#allocation2 + $0x81] sm:$0xff]
  %v917 = vld [vmem:[#allocation2 + $0x89] sm:$0x3]
  %v918 = vld [vmem:[#allocation2 + $0x91] sm:$0xff]
  %v919 = vld [vmem:[#allocation2 + $0x99] sm:$0x3]
  %v920 = vld [vmem:[%s3 + $0x1] sm:$0x1]
  %v921 = vlaneseq
  %v922 = vshrl.u32 %v921, 7
  %v923 = vsub.s32 0, %v922
  %v924 = vrot.slane %v920, %v923
  %v925 = vmul.f32 %v900, %v924
  %v926 = vmul.f32 %v901, %v924
  %v927 = vmul.f32 %v902, %v924
  %v928 = vmul.f32 %v903, %v924
  %v929 = vmul.f32 %v904, %v924
  %v930 = vmul.f32 %v905, %v924
  %v931 = vmul.f32 %v906, %v924
  %v932 = vmul.f32 %v907, %v924
  %v933 = vmul.f32 %v908, %v924
  %v934 = vmul.f32 %v909, %v924
  %v935 = vmul.f32 %v910, %v924
  %v936 = vmul.f32 %v911, %v924
  %v937 = vmul.f32 %v912, %v924
  %v938 = vmul.f32 %v913, %v924
  %v939 = vmul.f32 %v914, %v924
  %v940 = vmul.f32 %v915, %v924
  %v941 = vmul.f32 %v916, %v924
  %v942 = vmul.f32 %v917, %v924
  %v943 = vmul.f32 %v918, %v924
  %v944 = vmul.f32 %v919, %v924
  %v945 = vadd.f32 %v880, %v925
  %v946 = vadd.f32 %v881, %v926
  %v947 = vadd.f32 %v882, %v927
  %v948 = vadd.f32 %v883, %v928
  %v949 = vadd.f32 %v884, %v929
  %v950 = vadd.f32 %v885, %v930
  %v951 = vadd.f32 %v886, %v931
  %v952 = vadd.f32 %v887, %v932
  %v953 = vadd.f32 %v888, %v933
  %v954 = vadd.f32 %v889, %v934
  %v955 = vadd.f32 %v890, %v935
  %v956 = vadd.f32 %v891, %v936
  %v957 = vadd.f32 %v892, %v937
  %v958 = vadd.f32 %v893, %v938
  %v959 = vadd.f32 %v894, %v939
  %v960 = vadd.f32 %v895, %v940
  %v961 = vadd.f32 %v896, %v941
  %v962 = vadd.f32 %v897, %v942
  %v963 = vadd.f32 %v898, %v943
  %v964 = vadd.f32 %v899, %v944
  %v965 = vld [vmem:[#allocation2 + $0x2] sm:$0xff]
  %v966 = vld [vmem:[#allocation2 + $0xa] sm:$0x3]
  %v967 = vld [vmem:[#allocation2 + $0x12] sm:$0xff]
  %v968 = vld [vmem:[#allocation2 + $0x1a] sm:$0x3]
  %v969 = vld [vmem:[#allocation2 + $0x22] sm:$0xff]
  %v970 = vld [vmem:[#allocation2 + $0x2a] sm:$0x3]
  %v971 = vld [vmem:[#allocation2 + $0x32] sm:$0xff]
  %v972 = vld [vmem:[#allocation2 + $0x3a] sm:$0x3]
  %v973 = vld [vmem:[#allocation2 + $0x42] sm:$0xff]
  %v974 = vld [vmem:[#allocation2 + $0x4a] sm:$0x3]
  %v975 = vld [vmem:[#allocation2 + $0x52] sm:$0xff]
  %v976 = vld [vmem:[#allocation2 + $0x5a] sm:$0x3]
  %v977 = vld [vmem:[#allocation2 + $0x62] sm:$0xff]
  %v978 = vld [vmem:[#allocation2 + $0x6a] sm:$0x3]
  %v979 = vld [vmem:[#allocation2 + $0x72] sm:$0xff]
  %v980 = vld [vmem:[#allocation2 + $0x7a] sm:$0x3]
  %v981 = vld [vmem:[#allocation2 + $0x82] sm:$0xff]
  %v982 = vld [vmem:[#allocation2 + $0x8a] sm:$0x3]
  %v983 = vld [vmem:[#allocation2 + $0x92] sm:$0xff]
  %v984 = vld [vmem:[#allocation2 + $0x9a] sm:$0x3]
  %v985 = vld [vmem:[%s3 + $0x2] sm:$0x1]
  %v986 = vlaneseq
  %v987 = vshrl.u32 %v986, 7
  %v988 = vsub.s32 0, %v987
  %v989 = vrot.slane %v985, %v988
  %v990 = vmul.f32 %v965, %v989
  %v991 = vmul.f32 %v966, %v989
  %v992 = vmul.f32 %v967, %v989
  %v993 = vmul.f32 %v968, %v989
  %v994 = vmul.f32 %v969, %v989
  %v995 = vmul.f32 %v970, %v989
  %v996 = vmul.f32 %v971, %v989
  %v997 = vmul.f32 %v972, %v989
  %v998 = vmul.f32 %v973, %v989
  %v999 = vmul.f32 %v974, %v989
  %v1000 = vmul.f32 %v975, %v989
  %v1001 = vmul.f32 %v976, %v989
  %v1002 = vmul.f32 %v977, %v989
  %v1003 = vmul.f32 %v978, %v989
  %v1004 = vmul.f32 %v979, %v989
  %v1005 = vmul.f32 %v980, %v989
  %v1006 = vmul.f32 %v981, %v989
  %v1007 = vmul.f32 %v982, %v989
  %v1008 = vmul.f32 %v983, %v989
  %v1009 = vmul.f32 %v984, %v989
  %v1010 = vadd.f32 %v945, %v990
  %v1011 = vadd.f32 %v946, %v991
  %v1012 = vadd.f32 %v947, %v992
  %v1013 = vadd.f32 %v948, %v993
  %v1014 = vadd.f32 %v949, %v994
  %v1015 = vadd.f32 %v950, %v995
  %v1016 = vadd.f32 %v951, %v996
  %v1017 = vadd.f32 %v952, %v997
  %v1018 = vadd.f32 %v953, %v998
  %v1019 = vadd.f32 %v954, %v999
  %v1020 = vadd.f32 %v955, %v1000
  %v1021 = vadd.f32 %v956, %v1001
  %v1022 = vadd.f32 %v957, %v1002
  %v1023 = vadd.f32 %v958, %v1003
  %v1024 = vadd.f32 %v959, %v1004
  %v1025 = vadd.f32 %v960, %v1005
  %v1026 = vadd.f32 %v961, %v1006
  %v1027 = vadd.f32 %v962, %v1007
  %v1028 = vadd.f32 %v963, %v1008
  %v1029 = vadd.f32 %v964, %v1009
  %s1030 = scalar_lea.vmem [#allocation2], 16
  %v1031 = vld [vmem:[%s1030] sm:$0xff]
  %v1032 = vld [vmem:[%s1030 + $0x8] sm:$0x3]
  %v1033 = vld [vmem:[%s1030 + $0x10] sm:$0xff]
  %v1034 = vld [vmem:[%s1030 + $0x18] sm:$0x3]
  %v1035 = vld [vmem:[%s1030 + $0x20] sm:$0xff]
  %v1036 = vld [vmem:[%s1030 + $0x28] sm:$0x3]
  %v1037 = vld [vmem:[%s1030 + $0x30] sm:$0xff]
  %v1038 = vld [vmem:[%s1030 + $0x38] sm:$0x3]
  %v1039 = vld [vmem:[%s1030 + $0x40] sm:$0xff]
  %v1040 = vld [vmem:[%s1030 + $0x48] sm:$0x3]
  %v1041 = vld [vmem:[%s1030 + $0x50] sm:$0xff]
  %v1042 = vld [vmem:[%s1030 + $0x58] sm:$0x3]
  %v1043 = vld [vmem:[%s1030 + $0x60] sm:$0xff]
  %v1044 = vld [vmem:[%s1030 + $0x68] sm:$0x3]
  %v1045 = vld [vmem:[%s1030 + $0x70] sm:$0xff]
  %v1046 = vld [vmem:[%s1030 + $0x78] sm:$0x3]
  %v1047 = vld [vmem:[%s1030 + $0x80] sm:$0xff]
  %v1048 = vld [vmem:[%s1030 + $0x88] sm:$0x3]
  %v1049 = vld [vmem:[%s1030 + $0x90] sm:$0xff]
  %v1050 = vld [vmem:[%s1030 + $0x98] sm:$0x3]
  %v1051 = vld [vmem:[%s3 + $0x3] sm:$0x1]
  %v1052 = vlaneseq
  %v1053 = vshrl.u32 %v1052, 7
  %v1054 = vsub.s32 0, %v1053
  %v1055 = vrot.slane %v1051, %v1054
  %v1056 = vmul.f32 %v1031, %v1055
  %v1057 = vmul.f32 %v1032, %v1055
  %v1058 = vmul.f32 %v1033, %v1055
  %v1059 = vmul.f32 %v1034, %v1055
  %v1060 = vmul.f32 %v1035, %v1055
  %v1061 = vmul.f32 %v1036, %v1055
  %v1062 = vmul.f32 %v1037, %v1055
  %v1063 = vmul.f32 %v1038, %v1055
  %v1064 = vmul.f32 %v1039, %v1055
  %v1065 = vmul.f32 %v1040, %v1055
  %v1066 = vmul.f32 %v1041, %v1055
  %v1067 = vmul.f32 %v1042, %v1055
  %v1068 = vmul.f32 %v1043, %v1055
  %v1069 = vmul.f32 %v1044, %v1055
  %v1070 = vmul.f32 %v1045, %v1055
  %v1071 = vmul.f32 %v1046, %v1055
  %v1072 = vmul.f32 %v1047, %v1055
  %v1073 = vmul.f32 %v1048, %v1055
  %v1074 = vmul.f32 %v1049, %v1055
  %v1075 = vmul.f32 %v1050, %v1055
  %v1076 = vadd.f32 %v1010, %v1056
  %v1077 = vadd.f32 %v1011, %v1057
  %v1078 = vadd.f32 %v1012, %v1058
  %v1079 = vadd.f32 %v1013, %v1059
  %v1080 = vadd.f32 %v1014, %v1060
  %v1081 = vadd.f32 %v1015, %v1061
  %v1082 = vadd.f32 %v1016, %v1062
  %v1083 = vadd.f32 %v1017, %v1063
  %v1084 = vadd.f32 %v1018, %v1064
  %v1085 = vadd.f32 %v1019, %v1065
  %v1086 = vadd.f32 %v1020, %v1066
  %v1087 = vadd.f32 %v1021, %v1067
  %v1088 = vadd.f32 %v1022, %v1068
  %v1089 = vadd.f32 %v1023, %v1069
  %v1090 = vadd.f32 %v1024, %v1070
  %v1091 = vadd.f32 %v1025, %v1071
  %v1092 = vadd.f32 %v1026, %v1072
  %v1093 = vadd.f32 %v1027, %v1073
  %v1094 = vadd.f32 %v1028, %v1074
  %v1095 = vadd.f32 %v1029, %v1075
  %v1096 = vld [vmem:[%s1030 + $0x1] sm:$0xff]
  %v1097 = vld [vmem:[%s1030 + $0x9] sm:$0x3]
  %v1098 = vld [vmem:[%s1030 + $0x11] sm:$0xff]
  %v1099 = vld [vmem:[%s1030 + $0x19] sm:$0x3]
  %v1100 = vld [vmem:[%s1030 + $0x21] sm:$0xff]
  %v1101 = vld [vmem:[%s1030 + $0x29] sm:$0x3]
  %v1102 = vld [vmem:[%s1030 + $0x31] sm:$0xff]
  %v1103 = vld [vmem:[%s1030 + $0x39] sm:$0x3]
  %v1104 = vld [vmem:[%s1030 + $0x41] sm:$0xff]
  %v1105 = vld [vmem:[%s1030 + $0x49] sm:$0x3]
  %v1106 = vld [vmem:[%s1030 + $0x51] sm:$0xff]
  %v1107 = vld [vmem:[%s1030 + $0x59] sm:$0x3]
  %v1108 = vld [vmem:[%s1030 + $0x61] sm:$0xff]
  %v1109 = vld [vmem:[%s1030 + $0x69] sm:$0x3]
  %v1110 = vld [vmem:[%s1030 + $0x71] sm:$0xff]
  %v1111 = vld [vmem:[%s1030 + $0x79] sm:$0x3]
  %v1112 = vld [vmem:[%s1030 + $0x81] sm:$0xff]
  %v1113 = vld [vmem:[%s1030 + $0x89] sm:$0x3]
  %v1114 = vld [vmem:[%s1030 + $0x91] sm:$0xff]
  %v1115 = vld [vmem:[%s1030 + $0x99] sm:$0x3]
  %v1116 = vld [vmem:[%s3 + $0x4] sm:$0x1]
  %v1117 = vlaneseq
  %v1118 = vshrl.u32 %v1117, 7
  %v1119 = vsub.s32 0, %v1118
  %v1120 = vrot.slane %v1116, %v1119
  %v1121 = vmul.f32 %v1096, %v1120
  %v1122 = vmul.f32 %v1097, %v1120
  %v1123 = vmul.f32 %v1098, %v1120
  %v1124 = vmul.f32 %v1099, %v1120
  %v1125 = vmul.f32 %v1100, %v1120
  %v1126 = vmul.f32 %v1101, %v1120
  %v1127 = vmul.f32 %v1102, %v1120
  %v1128 = vmul.f32 %v1103, %v1120
  %v1129 = vmul.f32 %v1104, %v1120
  %v1130 = vmul.f32 %v1105, %v1120
  %v1131 = vmul.f32 %v1106, %v1120
  %v1132 = vmul.f32 %v1107, %v1120
  %v1133 = vmul.f32 %v1108, %v1120
  %v1134 = vmul.f32 %v1109, %v1120
  %v1135 = vmul.f32 %v1110, %v1120
  %v1136 = vmul.f32 %v1111, %v1120
  %v1137 = vmul.f32 %v1112, %v1120
  %v1138 = vmul.f32 %v1113, %v1120
  %v1139 = vmul.f32 %v1114, %v1120
  %v1140 = vmul.f32 %v1115, %v1120
  %v1141 = vadd.f32 %v1076, %v1121
  %v1142 = vadd.f32 %v1077, %v1122
  %v1143 = vadd.f32 %v1078, %v1123
  %v1144 = vadd.f32 %v1079, %v1124
  %v1145 = vadd.f32 %v1080, %v1125
  %v1146 = vadd.f32 %v1081, %v1126
  %v1147 = vadd.f32 %v1082, %v1127
  %v1148 = vadd.f32 %v1083, %v1128
  %v1149 = vadd.f32 %v1084, %v1129
  %v1150 = vadd.f32 %v1085, %v1130
  %v1151 = vadd.f32 %v1086, %v1131
  %v1152 = vadd.f32 %v1087, %v1132
  %v1153 = vadd.f32 %v1088, %v1133
  %v1154 = vadd.f32 %v1089, %v1134
  %v1155 = vadd.f32 %v1090, %v1135
  %v1156 = vadd.f32 %v1091, %v1136
  %v1157 = vadd.f32 %v1092, %v1137
  %v1158 = vadd.f32 %v1093, %v1138
  %v1159 = vadd.f32 %v1094, %v1139
  %v1160 = vadd.f32 %v1095, %v1140
  %v1161 = vld [vmem:[%s1030 + $0x2] sm:$0xff]
  %v1162 = vld [vmem:[%s1030 + $0xa] sm:$0x3]
  %v1163 = vld [vmem:[%s1030 + $0x12] sm:$0xff]
  %v1164 = vld [vmem:[%s1030 + $0x1a] sm:$0x3]
  %v1165 = vld [vmem:[%s1030 + $0x22] sm:$0xff]
  %v1166 = vld [vmem:[%s1030 + $0x2a] sm:$0x3]
  %v1167 = vld [vmem:[%s1030 + $0x32] sm:$0xff]
  %v1168 = vld [vmem:[%s1030 + $0x3a] sm:$0x3]
  %v1169 = vld [vmem:[%s1030 + $0x42] sm:$0xff]
  %v1170 = vld [vmem:[%s1030 + $0x4a] sm:$0x3]
  %v1171 = vld [vmem:[%s1030 + $0x52] sm:$0xff]
  %v1172 = vld [vmem:[%s1030 + $0x5a] sm:$0x3]
  %v1173 = vld [vmem:[%s1030 + $0x62] sm:$0xff]
  %v1174 = vld [vmem:[%s1030 + $0x6a] sm:$0x3]
  %v1175 = vld [vmem:[%s1030 + $0x72] sm:$0xff]
  %v1176 = vld [vmem:[%s1030 + $0x7a] sm:$0x3]
  %v1177 = vld [vmem:[%s1030 + $0x82] sm:$0xff]
  %v1178 = vld [vmem:[%s1030 + $0x8a] sm:$0x3]
  %v1179 = vld [vmem:[%s1030 + $0x92] sm:$0xff]
  %v1180 = vld [vmem:[%s1030 + $0x9a] sm:$0x3]
  %v1181 = vld [vmem:[%s3 + $0x5] sm:$0x1]
  %v1182 = vlaneseq
  %v1183 = vshrl.u32 %v1182, 7
  %v1184 = vsub.s32 0, %v1183
  %v1185 = vrot.slane %v1181, %v1184
  %v1186 = vmul.f32 %v1161, %v1185
  %v1187 = vmul.f32 %v1162, %v1185
  %v1188 = vmul.f32 %v1163, %v1185
  %v1189 = vmul.f32 %v1164, %v1185
  %v1190 = vmul.f32 %v1165, %v1185
  %v1191 = vmul.f32 %v1166, %v1185
  %v1192 = vmul.f32 %v1167, %v1185
  %v1193 = vmul.f32 %v1168, %v1185
  %v1194 = vmul.f32 %v1169, %v1185
  %v1195 = vmul.f32 %v1170, %v1185
  %v1196 = vmul.f32 %v1171, %v1185
  %v1197 = vmul.f32 %v1172, %v1185
  %v1198 = vmul.f32 %v1173, %v1185
  %v1199 = vmul.f32 %v1174, %v1185
  %v1200 = vmul.f32 %v1175, %v1185
  %v1201 = vmul.f32 %v1176, %v1185
  %v1202 = vmul.f32 %v1177, %v1185
  %v1203 = vmul.f32 %v1178, %v1185
  %v1204 = vmul.f32 %v1179, %v1185
  %v1205 = vmul.f32 %v1180, %v1185
  %v1206 = vadd.f32 %v1141, %v1186
  %v1207 = vadd.f32 %v1142, %v1187
  %v1208 = vadd.f32 %v1143, %v1188
  %v1209 = vadd.f32 %v1144, %v1189
  %v1210 = vadd.f32 %v1145, %v1190
  %v1211 = vadd.f32 %v1146, %v1191
  %v1212 = vadd.f32 %v1147, %v1192
  %v1213 = vadd.f32 %v1148, %v1193
  %v1214 = vadd.f32 %v1149, %v1194
  %v1215 = vadd.f32 %v1150, %v1195
  %v1216 = vadd.f32 %v1151, %v1196
  %v1217 = vadd.f32 %v1152, %v1197
  %v1218 = vadd.f32 %v1153, %v1198
  %v1219 = vadd.f32 %v1154, %v1199
  %v1220 = vadd.f32 %v1155, %v1200
  %v1221 = vadd.f32 %v1156, %v1201
  %v1222 = vadd.f32 %v1157, %v1202
  %v1223 = vadd.f32 %v1158, %v1203
  %v1224 = vadd.f32 %v1159, %v1204
  %v1225 = vadd.f32 %v1160, %v1205
  %v1226 = vld [vmem:[%s839] sm:$0xff]
  %v1227 = vld [vmem:[%s839 + $0x8] sm:$0x3]
  %v1228 = vld [vmem:[%s839 + $0x10] sm:$0xff]
  %v1229 = vld [vmem:[%s839 + $0x18] sm:$0x3]
  %v1230 = vld [vmem:[%s839 + $0x20] sm:$0xff]
  %v1231 = vld [vmem:[%s839 + $0x28] sm:$0x3]
  %v1232 = vld [vmem:[%s839 + $0x30] sm:$0xff]
  %v1233 = vld [vmem:[%s839 + $0x38] sm:$0x3]
  %v1234 = vld [vmem:[%s839 + $0x40] sm:$0xff]
  %v1235 = vld [vmem:[%s839 + $0x48] sm:$0x3]
  %v1236 = vld [vmem:[%s839 + $0x50] sm:$0xff]
  %v1237 = vld [vmem:[%s839 + $0x58] sm:$0x3]
  %v1238 = vld [vmem:[%s839 + $0x60] sm:$0xff]
  %v1239 = vld [vmem:[%s839 + $0x68] sm:$0x3]
  %v1240 = vld [vmem:[%s839 + $0x70] sm:$0xff]
  %v1241 = vld [vmem:[%s839 + $0x78] sm:$0x3]
  %v1242 = vld [vmem:[%s839 + $0x80] sm:$0xff]
  %v1243 = vld [vmem:[%s839 + $0x88] sm:$0x3]
  %v1244 = vld [vmem:[%s839 + $0x90] sm:$0xff]
  %v1245 = vld [vmem:[%s839 + $0x98] sm:$0x3]
  %v1246 = vld [vmem:[%s3 + $0x6] sm:$0x1]
  %v1247 = vlaneseq
  %v1248 = vshrl.u32 %v1247, 7
  %v1249 = vsub.s32 0, %v1248
  %v1250 = vrot.slane %v1246, %v1249
  %v1251 = vmul.f32 %v1226, %v1250
  %v1252 = vmul.f32 %v1227, %v1250
  %v1253 = vmul.f32 %v1228, %v1250
  %v1254 = vmul.f32 %v1229, %v1250
  %v1255 = vmul.f32 %v1230, %v1250
  %v1256 = vmul.f32 %v1231, %v1250
  %v1257 = vmul.f32 %v1232, %v1250
  %v1258 = vmul.f32 %v1233, %v1250
  %v1259 = vmul.f32 %v1234, %v1250
  %v1260 = vmul.f32 %v1235, %v1250
  %v1261 = vmul.f32 %v1236, %v1250
  %v1262 = vmul.f32 %v1237, %v1250
  %v1263 = vmul.f32 %v1238, %v1250
  %v1264 = vmul.f32 %v1239, %v1250
  %v1265 = vmul.f32 %v1240, %v1250
  %v1266 = vmul.f32 %v1241, %v1250
  %v1267 = vmul.f32 %v1242, %v1250
  %v1268 = vmul.f32 %v1243, %v1250
  %v1269 = vmul.f32 %v1244, %v1250
  %v1270 = vmul.f32 %v1245, %v1250
  %v1271 = vadd.f32 %v1206, %v1251
  %v1272 = vadd.f32 %v1207, %v1252
  %v1273 = vadd.f32 %v1208, %v1253
  %v1274 = vadd.f32 %v1209, %v1254
  %v1275 = vadd.f32 %v1210, %v1255
  %v1276 = vadd.f32 %v1211, %v1256
  %v1277 = vadd.f32 %v1212, %v1257
  %v1278 = vadd.f32 %v1213, %v1258
  %v1279 = vadd.f32 %v1214, %v1259
  %v1280 = vadd.f32 %v1215, %v1260
  %v1281 = vadd.f32 %v1216, %v1261
  %v1282 = vadd.f32 %v1217, %v1262
  %v1283 = vadd.f32 %v1218, %v1263
  %v1284 = vadd.f32 %v1219, %v1264
  %v1285 = vadd.f32 %v1220, %v1265
  %v1286 = vadd.f32 %v1221, %v1266
  %v1287 = vadd.f32 %v1222, %v1267
  %v1288 = vadd.f32 %v1223, %v1268
  %v1289 = vadd.f32 %v1224, %v1269
  %v1290 = vadd.f32 %v1225, %v1270
  %v1291 = vld [vmem:[%s839 + $0x1] sm:$0xff]
  %v1292 = vld [vmem:[%s839 + $0x9] sm:$0x3]
  %v1293 = vld [vmem:[%s839 + $0x11] sm:$0xff]
  %v1294 = vld [vmem:[%s839 + $0x19] sm:$0x3]
  %v1295 = vld [vmem:[%s839 + $0x21] sm:$0xff]
  %v1296 = vld [vmem:[%s839 + $0x29] sm:$0x3]
  %v1297 = vld [vmem:[%s839 + $0x31] sm:$0xff]
  %v1298 = vld [vmem:[%s839 + $0x39] sm:$0x3]
  %v1299 = vld [vmem:[%s839 + $0x41] sm:$0xff]
  %v1300 = vld [vmem:[%s839 + $0x49] sm:$0x3]
  %v1301 = vld [vmem:[%s839 + $0x51] sm:$0xff]
  %v1302 = vld [vmem:[%s839 + $0x59] sm:$0x3]
  %v1303 = vld [vmem:[%s839 + $0x61] sm:$0xff]
  %v1304 = vld [vmem:[%s839 + $0x69] sm:$0x3]
  %v1305 = vld [vmem:[%s839 + $0x71] sm:$0xff]
  %v1306 = vld [vmem:[%s839 + $0x79] sm:$0x3]
  %v1307 = vld [vmem:[%s839 + $0x81] sm:$0xff]
  %v1308 = vld [vmem:[%s839 + $0x89] sm:$0x3]
  %v1309 = vld [vmem:[%s839 + $0x91] sm:$0xff]
  %v1310 = vld [vmem:[%s839 + $0x99] sm:$0x3]
  %v1311 = vld [vmem:[%s3 + $0x7] sm:$0x1]
  %v1312 = vlaneseq
  %v1313 = vshrl.u32 %v1312, 7
  %v1314 = vsub.s32 0, %v1313
  %v1315 = vrot.slane %v1311, %v1314
  %v1316 = vmul.f32 %v1291, %v1315
  %v1317 = vmul.f32 %v1292, %v1315
  %v1318 = vmul.f32 %v1293, %v1315
  %v1319 = vmul.f32 %v1294, %v1315
  %v1320 = vmul.f32 %v1295, %v1315
  %v1321 = vmul.f32 %v1296, %v1315
  %v1322 = vmul.f32 %v1297, %v1315
  %v1323 = vmul.f32 %v1298, %v1315
  %v1324 = vmul.f32 %v1299, %v1315
  %v1325 = vmul.f32 %v1300, %v1315
  %v1326 = vmul.f32 %v1301, %v1315
  %v1327 = vmul.f32 %v1302, %v1315
  %v1328 = vmul.f32 %v1303, %v1315
  %v1329 = vmul.f32 %v1304, %v1315
  %v1330 = vmul.f32 %v1305, %v1315
  %v1331 = vmul.f32 %v1306, %v1315
  %v1332 = vmul.f32 %v1307, %v1315
  %v1333 = vmul.f32 %v1308, %v1315
  %v1334 = vmul.f32 %v1309, %v1315
  %v1335 = vmul.f32 %v1310, %v1315
  %v1336 = vadd.f32 %v1271, %v1316
  %v1337 = vadd.f32 %v1272, %v1317
  %v1338 = vadd.f32 %v1273, %v1318
  %v1339 = vadd.f32 %v1274, %v1319
  %v1340 = vadd.f32 %v1275, %v1320
  %v1341 = vadd.f32 %v1276, %v1321
  %v1342 = vadd.f32 %v1277, %v1322
  %v1343 = vadd.f32 %v1278, %v1323
  %v1344 = vadd.f32 %v1279, %v1324
  %v1345 = vadd.f32 %v1280, %v1325
  %v1346 = vadd.f32 %v1281, %v1326
  %v1347 = vadd.f32 %v1282, %v1327
  %v1348 = vadd.f32 %v1283, %v1328
  %v1349 = vadd.f32 %v1284, %v1329
  %v1350 = vadd.f32 %v1285, %v1330
  %v1351 = vadd.f32 %v1286, %v1331
  %v1352 = vadd.f32 %v1287, %v1332
  %v1353 = vadd.f32 %v1288, %v1333
  %v1354 = vadd.f32 %v1289, %v1334
  %v1355 = vadd.f32 %v1290, %v1335
  %v1356 = vld [vmem:[%s839 + $0x2] sm:$0xff]
  %v1357 = vld [vmem:[%s839 + $0xa] sm:$0x3]
  %v1358 = vld [vmem:[%s839 + $0x12] sm:$0xff]
  %v1359 = vld [vmem:[%s839 + $0x1a] sm:$0x3]
  %v1360 = vld [vmem:[%s839 + $0x22] sm:$0xff]
  %v1361 = vld [vmem:[%s839 + $0x2a] sm:$0x3]
  %v1362 = vld [vmem:[%s839 + $0x32] sm:$0xff]
  %v1363 = vld [vmem:[%s839 + $0x3a] sm:$0x3]
  %v1364 = vld [vmem:[%s839 + $0x42] sm:$0xff]
  %v1365 = vld [vmem:[%s839 + $0x4a] sm:$0x3]
  %v1366 = vld [vmem:[%s839 + $0x52] sm:$0xff]
  %v1367 = vld [vmem:[%s839 + $0x5a] sm:$0x3]
  %v1368 = vld [vmem:[%s839 + $0x62] sm:$0xff]
  %v1369 = vld [vmem:[%s839 + $0x6a] sm:$0x3]
  %v1370 = vld [vmem:[%s839 + $0x72] sm:$0xff]
  %v1371 = vld [vmem:[%s839 + $0x7a] sm:$0x3]
  %v1372 = vld [vmem:[%s839 + $0x82] sm:$0xff]
  %v1373 = vld [vmem:[%s839 + $0x8a] sm:$0x3]
  %v1374 = vld [vmem:[%s839 + $0x92] sm:$0xff]
  %v1375 = vld [vmem:[%s839 + $0x9a] sm:$0x3]
  %v1376 = vld [vmem:[%s3 + $0x8] sm:$0x1]
  %v1377 = vlaneseq
  %v1378 = vshrl.u32 %v1377, 7
  %v1379 = vsub.s32 0, %v1378
  %v1380 = vrot.slane %v1376, %v1379
  %v1381 = vmul.f32 %v1356, %v1380
  %v1382 = vmul.f32 %v1357, %v1380
  %v1383 = vmul.f32 %v1358, %v1380
  %v1384 = vmul.f32 %v1359, %v1380
  %v1385 = vmul.f32 %v1360, %v1380
  %v1386 = vmul.f32 %v1361, %v1380
  %v1387 = vmul.f32 %v1362, %v1380
  %v1388 = vmul.f32 %v1363, %v1380
  %v1389 = vmul.f32 %v1364, %v1380
  %v1390 = vmul.f32 %v1365, %v1380
  %v1391 = vmul.f32 %v1366, %v1380
  %v1392 = vmul.f32 %v1367, %v1380
  %v1393 = vmul.f32 %v1368, %v1380
  %v1394 = vmul.f32 %v1369, %v1380
  %v1395 = vmul.f32 %v1370, %v1380
  %v1396 = vmul.f32 %v1371, %v1380
  %v1397 = vmul.f32 %v1372, %v1380
  %v1398 = vmul.f32 %v1373, %v1380
  %v1399 = vmul.f32 %v1374, %v1380
  %v1400 = vmul.f32 %v1375, %v1380
  %v1401 = vadd.f32 %v1336, %v1381
  %v1402 = vadd.f32 %v1337, %v1382
  %v1403 = vadd.f32 %v1338, %v1383
  %v1404 = vadd.f32 %v1339, %v1384
  %v1405 = vadd.f32 %v1340, %v1385
  %v1406 = vadd.f32 %v1341, %v1386
  %v1407 = vadd.f32 %v1342, %v1387
  %v1408 = vadd.f32 %v1343, %v1388
  %v1409 = vadd.f32 %v1344, %v1389
  %v1410 = vadd.f32 %v1345, %v1390
  %v1411 = vadd.f32 %v1346, %v1391
  %v1412 = vadd.f32 %v1347, %v1392
  %v1413 = vadd.f32 %v1348, %v1393
  %v1414 = vadd.f32 %v1349, %v1394
  %v1415 = vadd.f32 %v1350, %v1395
  %v1416 = vadd.f32 %v1351, %v1396
  %v1417 = vadd.f32 %v1352, %v1397
  %v1418 = vadd.f32 %v1353, %v1398
  %v1419 = vadd.f32 %v1354, %v1399
  %v1420 = vadd.f32 %v1355, %v1400
  %v1421 = vsel %vm813, %v1401, 0.0
  %1422 = vadd.xlane.f32.xlu0 %v1421
  %v1423 = vpop.xlane.xlu0 %1422
  %vm1424 = vcmask 517120
  %v1425 = vsel %vm1424, %v1402, 0.0
  %1426 = vadd.xlane.f32.xlu0 %v1425
  %v1427 = vpop.xlane.xlu0 %1426
  %v1428 = vsel %vm813, %v1403, 0.0
  %1429 = vadd.xlane.f32.xlu0 %v1428
  %v1430 = vpop.xlane.xlu0 %1429
  %v1431 = vsel %vm1424, %v1404, 0.0
  %1432 = vadd.xlane.f32.xlu0 %v1431
  %v1433 = vpop.xlane.xlu0 %1432
  %v1434 = vsel %vm813, %v1405, 0.0
  %1435 = vadd.xlane.f32.xlu0 %v1434
  %v1436 = vpop.xlane.xlu0 %1435
  %v1437 = vsel %vm1424, %v1406, 0.0
  %1438 = vadd.xlane.f32.xlu0 %v1437
  %v1439 = vpop.xlane.xlu0 %1438
  %v1440 = vsel %vm813, %v1407, 0.0
  %1441 = vadd.xlane.f32.xlu0 %v1440
  %v1442 = vpop.xlane.xlu0 %1441
  %v1443 = vsel %vm1424, %v1408, 0.0
  %1444 = vadd.xlane.f32.xlu0 %v1443
  %v1445 = vpop.xlane.xlu0 %1444
  %v1446 = vsel %vm813, %v1409, 0.0
  %1447 = vadd.xlane.f32.xlu0 %v1446
  %v1448 = vpop.xlane.xlu0 %1447
  %v1449 = vsel %vm1424, %v1410, 0.0
  %1450 = vadd.xlane.f32.xlu0 %v1449
  %v1451 = vpop.xlane.xlu0 %1450
  %v1452 = vsel %vm813, %v1411, 0.0
  %1453 = vadd.xlane.f32.xlu0 %v1452
  %v1454 = vpop.xlane.xlu0 %1453
  %v1455 = vsel %vm1424, %v1412, 0.0
  %1456 = vadd.xlane.f32.xlu0 %v1455
  %v1457 = vpop.xlane.xlu0 %1456
  %v1458 = vsel %vm813, %v1413, 0.0
  %1459 = vadd.xlane.f32.xlu0 %v1458
  %v1460 = vpop.xlane.xlu0 %1459
  %v1461 = vsel %vm1424, %v1414, 0.0
  %1462 = vadd.xlane.f32.xlu0 %v1461
  %v1463 = vpop.xlane.xlu0 %1462
  %v1464 = vsel %vm813, %v1415, 0.0
  %1465 = vadd.xlane.f32.xlu0 %v1464
  %v1466 = vpop.xlane.xlu0 %1465
  %v1467 = vsel %vm1424, %v1416, 0.0
  %1468 = vadd.xlane.f32.xlu0 %v1467
  %v1469 = vpop.xlane.xlu0 %1468
  %v1470 = vsel %vm813, %v1417, 0.0
  %1471 = vadd.xlane.f32.xlu0 %v1470
  %v1472 = vpop.xlane.xlu0 %1471
  %v1473 = vsel %vm1424, %v1418, 0.0
  %1474 = vadd.xlane.f32.xlu0 %v1473
  %v1475 = vpop.xlane.xlu0 %1474
  %v1476 = vsel %vm813, %v1419, 0.0
  %1477 = vadd.xlane.f32.xlu0 %v1476
  %v1478 = vpop.xlane.xlu0 %1477
  %v1479 = vsel %vm1424, %v1420, 0.0
  %1480 = vadd.xlane.f32.xlu0 %v1479
  %v1481 = vpop.xlane.xlu0 %1480
  %v1482 = vld [vmem:[#allocation3] sm:$0x1]
  %v1484 = vlaneseq
  %v1485 = vshrl.u32 %v1484, 7
  %v1486 = vsub.s32 0, %v1485
  %v1487 = vrot.slane %v1482, %v1486
  %1488 = vset.pattern.permute.xlu0 0
  %1489 = vperm.xlu0 %1488, %v1487
  %v1490 = vpop.permute.xlu0 %1489
  %v1492 = vadd.f32 %v1423, %v1490
  %v1493 = vadd.f32 %v1427, %v1490
  %v1494 = vadd.f32 %v1430, %v1490
  %v1495 = vadd.f32 %v1433, %v1490
  %v1496 = vadd.f32 %v1436, %v1490
  %v1497 = vadd.f32 %v1439, %v1490
  %v1498 = vadd.f32 %v1442, %v1490
  %v1499 = vadd.f32 %v1445, %v1490
  %v1500 = vadd.f32 %v1448, %v1490
  %v1501 = vadd.f32 %v1451, %v1490
  %v1502 = vadd.f32 %v1454, %v1490
  %v1503 = vadd.f32 %v1457, %v1490
  %v1504 = vadd.f32 %v1460, %v1490
  %v1505 = vadd.f32 %v1463, %v1490
  %v1506 = vadd.f32 %v1466, %v1490
  %v1507 = vadd.f32 %v1469, %v1490
  %v1508 = vadd.f32 %v1472, %v1490
  %v1509 = vadd.f32 %v1475, %v1490
  %v1510 = vadd.f32 %v1478, %v1490
  %v1511 = vadd.f32 %v1481, %v1490
  %v1532 = vlaneseq
  %v1533 = vand.u32 %v1532, 127
  %v1534 = vlaneseq
  %v1535 = vshrl.u32 %v1534, 7
  %v1536 = vsub.s32 %v1533, %v1535
  %v1537 = vrot.slane %v1492, %v1536
  %v1538 = vadd.s32 %v1533, 4294967288
  %v1539 = vlaneseq
  %v1540 = vshrl.u32 %v1539, 7
  %v1541 = vsub.s32 %v1538, %v1540
  %v1542 = vrot.slane %v1493, %v1541
  %vm1543 = vcmask 130112
  %v1544 = vsel %vm1543, %v1542, %v1537
  %v1545 = vlaneseq
  %v1546 = vshrl.u32 %v1545, 7
  %v1547 = vsub.s32 %v1533, %v1546
  %v1548 = vrot.slane %v1494, %v1547
  %v1549 = vlaneseq
  %v1550 = vshrl.u32 %v1549, 7
  %v1551 = vsub.s32 %v1538, %v1550
  %v1552 = vrot.slane %v1495, %v1551
  %v1553 = vsel %vm1543, %v1552, %v1548
  %v1554 = vlaneseq
  %v1555 = vshrl.u32 %v1554, 7
  %v1556 = vsub.s32 %v1533, %v1555
  %v1557 = vrot.slane %v1496, %v1556
  %v1558 = vlaneseq
  %v1559 = vshrl.u32 %v1558, 7
  %v1560 = vsub.s32 %v1538, %v1559
  %v1561 = vrot.slane %v1497, %v1560
  %v1562 = vsel %vm1543, %v1561, %v1557
  %v1563 = vlaneseq
  %v1564 = vshrl.u32 %v1563, 7
  %v1565 = vsub.s32 %v1533, %v1564
  %v1566 = vrot.slane %v1498, %v1565
  %v1567 = vlaneseq
  %v1568 = vshrl.u32 %v1567, 7
  %v1569 = vsub.s32 %v1538, %v1568
  %v1570 = vrot.slane %v1499, %v1569
  %v1571 = vsel %vm1543, %v1570, %v1566
  %v1572 = vlaneseq
  %v1573 = vshrl.u32 %v1572, 7
  %v1574 = vsub.s32 %v1533, %v1573
  %v1575 = vrot.slane %v1500, %v1574
  %v1576 = vlaneseq
  %v1577 = vshrl.u32 %v1576, 7
  %v1578 = vsub.s32 %v1538, %v1577
  %v1579 = vrot.slane %v1501, %v1578
  %v1580 = vsel %vm1543, %v1579, %v1575
  %v1581 = vlaneseq
  %v1582 = vshrl.u32 %v1581, 7
  %v1583 = vsub.s32 %v1533, %v1582
  %v1584 = vrot.slane %v1502, %v1583
  %v1585 = vlaneseq
  %v1586 = vshrl.u32 %v1585, 7
  %v1587 = vsub.s32 %v1538, %v1586
  %v1588 = vrot.slane %v1503, %v1587
  %v1589 = vsel %vm1543, %v1588, %v1584
  %v1590 = vlaneseq
  %v1591 = vshrl.u32 %v1590, 7
  %v1592 = vsub.s32 %v1533, %v1591
  %v1593 = vrot.slane %v1504, %v1592
  %v1594 = vlaneseq
  %v1595 = vshrl.u32 %v1594, 7
  %v1596 = vsub.s32 %v1538, %v1595
  %v1597 = vrot.slane %v1505, %v1596
  %v1598 = vsel %vm1543, %v1597, %v1593
  %v1599 = vlaneseq
  %v1600 = vshrl.u32 %v1599, 7
  %v1601 = vsub.s32 %v1533, %v1600
  %v1602 = vrot.slane %v1506, %v1601
  %v1603 = vlaneseq
  %v1604 = vshrl.u32 %v1603, 7
  %v1605 = vsub.s32 %v1538, %v1604
  %v1606 = vrot.slane %v1507, %v1605
  %v1607 = vsel %vm1543, %v1606, %v1602
  %v1608 = vlaneseq
  %v1609 = vshrl.u32 %v1608, 7
  %v1610 = vsub.s32 %v1533, %v1609
  %v1611 = vrot.slane %v1508, %v1610
  %v1612 = vlaneseq
  %v1613 = vshrl.u32 %v1612, 7
  %v1614 = vsub.s32 %v1538, %v1613
  %v1615 = vrot.slane %v1509, %v1614
  %v1616 = vsel %vm1543, %v1615, %v1611
  %v1617 = vlaneseq
  %v1618 = vshrl.u32 %v1617, 7
  %v1619 = vsub.s32 %v1533, %v1618
  %v1620 = vrot.slane %v1510, %v1619
  %v1621 = vlaneseq
  %v1622 = vshrl.u32 %v1621, 7
  %v1623 = vsub.s32 %v1538, %v1622
  %v1624 = vrot.slane %v1511, %v1623
  %v1625 = vsel %vm1543, %v1624, %v1620
  %vm1626 = vcmask 1041409
  %v1627 = vsel %vm1626, %v1553, %v1544
  %vm1628 = vcmask 1042434
  %v1629 = vsel %vm1628, %v1562, %v1627
  %vm1630 = vcmask 1043459
  %v1631 = vsel %vm1630, %v1571, %v1629
  %vm1632 = vcmask 1044484
  %v1633 = vsel %vm1632, %v1580, %v1631
  %vm1634 = vcmask 1045509
  %v1635 = vsel %vm1634, %v1589, %v1633
  %vm1636 = vcmask 1046534
  %v1637 = vsel %vm1636, %v1598, %v1635
  %vm1638 = vcmask 1047559
  %v1639 = vsel %vm1638, %v1607, %v1637
  %v1640 = vsel %vm1626, %v1625, %v1616
  %vm1643 = vcmask 80896
  %1644 = vst.msk [vmem:[%s5] sm:$0xff] %vm1643, %v1639
  %vm1645 = vcmask 74752
  %1646 = vst.msk [vmem:[%s5 + $0x8] sm:$0x3] %vm1645, %v1640
  // Predicated region
  $region22: #{model_forward.1} parent=0 // pred_check
    _
  $region23: #{model_forward.1} parent=0 // pred_check_branch
    %1648 = sbr.rel (0) target = $region25
  $region24: #{model_forward.1} parent=0 // pred_region
    _
  $region25: #{model_forward.1} parent=0 // pred_fallthru
    _
  // Predicated region
  $region26: #{model_forward.1} parent=0 // pred_check
    _
  $region27: #{model_forward.1} parent=0 // pred_check_branch
    %1650 = sbr.rel (0) target = $region29
  $region28: #{model_forward.1} parent=0 // pred_region
    _
  $region29: #{model_forward.1} parent=0 // pred_fallthru
    _

</llo_original>
